<compile_context>
chip_gen: v5e
topology: v5e:2x2
jax: 0.10.0
libtpu: 0.0.40
codegen_flags: <defaults>
</compile_context>

<pallas_src>
import functools

import jax
import jax.numpy as jnp
from jax.experimental import pallas as pl
from jax.experimental.pallas import tpu as pltpu

C_DTYPE = jnp.bfloat16        # MXU operand dtype for the heavy conv matmuls
EPS = 1e-5                    # BatchNorm1d eps


def _round_up(x, m):
    return (x + m - 1) // m * m


def _softplus(x):
    # numerically stable softplus, matches F.softplus
    return jnp.maximum(x, 0.0) + jnp.log1p(jnp.exp(-jnp.abs(x)))


def _row_tiling(rows, max_tile=512):
    """Pick (tile, padded_rows) satisfying the (8,128) block constraints."""
    if rows <= max_tile:
        tile = _round_up(rows, 8)
        return tile, tile            # single full block (full-dim => legal)
    tile = max_tile                  # multiple of 128
    return tile, _round_up(rows, tile)


# ---------------------------------------------------------------------------
# Embedding linear (row-tiled, parallel grid)
# ---------------------------------------------------------------------------
def _linear_kernel(x_ref, w_ref, b_ref, o_ref):
    o_ref[...] = (
        jnp.dot(x_ref[...], w_ref[...], preferred_element_type=jnp.float32)
        + b_ref[...]
    )


def linear(x_pad, w, b, *, tile_r):
    rows, fin = x_pad.shape
    fout = w.shape[1]
    return pl.pallas_call(
        _linear_kernel,
        out_shape=jax.ShapeDtypeStruct((rows, fout), jnp.float32),
        grid_spec=pltpu.PrefetchScalarGridSpec(
            num_scalar_prefetch=0,
            grid=(rows // tile_r,),
            in_specs=[
                pl.BlockSpec((tile_r, fin), lambda i: (i, 0)),
                pl.BlockSpec((fin, fout), lambda i: (0, 0)),
                pl.BlockSpec((1, fout), lambda i: (0, 0)),
            ],
            out_specs=pl.BlockSpec((tile_r, fout), lambda i: (i, 0)),
        ),
        compiler_params=pltpu.CompilerParams(
            dimension_semantics=("parallel",)),
    )(x_pad, w, b.reshape(1, -1))


# ---------------------------------------------------------------------------
# Fused CGConv + residual + BatchNorm (+ReLU) per layer.
# Grid: edge tiles as a reduction ("arbitrary") axis; output [N,C] is the
# VMEM-resident accumulator (same block every step), finalized on last step.
# ---------------------------------------------------------------------------
def _conv_bn_kernel(n_real, c, apply_relu,
                    hd_ref, hs_ref, e_ref,
                    wd_ref, ws_ref, we_ref, b_ref,
                    scat_ref, xres_ref, gamma_ref, beta_ref,
                    o_ref):
    k = pl.program_id(0)

    @pl.when(k == 0)
    def _init():
        o_ref[...] = jnp.zeros_like(o_ref)

    # Fused lin_f|lin_s projection, 2C = 128 lanes wide; z is never built:
    #   z @ W  ==  x_i @ W[:C] + x_j @ W[C:2C] + e @ W[2C:]
    fs = (jnp.dot(hd_ref[...], wd_ref[...], preferred_element_type=jnp.float32)
          + jnp.dot(hs_ref[...], ws_ref[...], preferred_element_type=jnp.float32)
          + jnp.dot(e_ref[...], we_ref[...], preferred_element_type=jnp.float32)
          + b_ref[...])
    msg = jax.nn.sigmoid(fs[:, :c]) * _softplus(fs[:, c:])      # [tile_e, C] f32

    # scatter-add over destination nodes: bf16 one-hot (exact), f32 accumulate
    o_ref[...] += jnp.dot(scat_ref[...], msg.astype(scat_ref.dtype),
                          preferred_element_type=jnp.float32)

    @pl.when(k == pl.num_programs(0) - 1)
    def _finalize():
        h = o_ref[...] + xres_ref[...]                           # CGConv residual
        # BatchNorm1d, training-mode batch stats over the REAL rows only
        mask = jax.lax.broadcasted_iota(jnp.int32, h.shape, 0) < n_real
        inv_n = 1.0 / float(n_real)
        mean = jnp.sum(jnp.where(mask, h, 0.0), axis=0, keepdims=True) * inv_n
        var = jnp.sum(jnp.where(mask, (h - mean) ** 2, 0.0),
                      axis=0, keepdims=True) * inv_n
        hn = (h - mean) * jax.lax.rsqrt(var + EPS)
        hn = hn * gamma_ref[...] + beta_ref[...]
        if apply_relu:                    # relu on all but the last conv layer
            hn = jnp.maximum(hn, 0.0)
        # dropout is identity (drop_ratio=0)
        o_ref[...] = hn


def cgconv_bn(h_dst, h_src, e_emb, w_dst, w_src, w_e, bias,
              scat, x_res, gamma, beta, *, n_real, apply_relu, tile_e):
    n_pad, c = x_res.shape
    e_pad = h_dst.shape[0]
    cost = pl.CostEstimate(
        flops=2 * e_pad * c * (2 * c) * 3 + 2 * n_pad * e_pad * c,
        transcendentals=3 * e_pad * c,
        bytes_accessed=(3 * e_pad * c * 2 + n_pad * e_pad * 2
                        + 3 * c * 2 * c * 2 + 2 * c * 4
                        + 2 * n_pad * c * 4 + 2 * c * 4),
    )
    return pl.pallas_call(
        functools.partial(_conv_bn_kernel, n_real, c, apply_relu),
        out_shape=jax.ShapeDtypeStruct((n_pad, c), jnp.float32),
        grid_spec=pltpu.PrefetchScalarGridSpec(
            num_scalar_prefetch=0,
            grid=(e_pad // tile_e,),
            in_specs=[
                pl.BlockSpec((tile_e, c), lambda k: (k, 0)),      # h_dst (x_i)
                pl.BlockSpec((tile_e, c), lambda k: (k, 0)),      # h_src (x_j)
                pl.BlockSpec((tile_e, c), lambda k: (k, 0)),      # edge emb
                pl.BlockSpec((c, 2 * c), lambda k: (0, 0)),       # W rows for x_i
                pl.BlockSpec((c, 2 * c), lambda k: (0, 0)),       # W rows for x_j
                pl.BlockSpec((c, 2 * c), lambda k: (0, 0)),       # W rows for e
                pl.BlockSpec((1, 2 * c), lambda k: (0, 0)),       # fused bias
                pl.BlockSpec((n_pad, tile_e), lambda k: (0, k)),  # scatter one-hot
                pl.BlockSpec((n_pad, c), lambda k: (0, 0)),       # residual x
                pl.BlockSpec((1, c), lambda k: (0, 0)),           # BN gamma
                pl.BlockSpec((1, c), lambda k: (0, 0)),           # BN beta
            ],
            out_specs=pl.BlockSpec((n_pad, c), lambda k: (0, 0)),
        ),
        compiler_params=pltpu.CompilerParams(
            dimension_semantics=("arbitrary",),
            vmem_limit_bytes=48 * 1024 * 1024),
        cost_estimate=cost,
    )(h_dst, h_src, e_emb, w_dst, w_src, w_e, bias, scat, x_res, gamma, beta)


# ---------------------------------------------------------------------------
# Mean-pool (tiled N reduction) + prediction MLP head, fused in one kernel.
# ---------------------------------------------------------------------------
def _head_kernel(pool_ref, h_ref, invc_ref, w1_ref, b1_ref, w2_ref, b2_ref,
                 wo_ref, bo_ref, o_ref, pooled_ref):
    k = pl.program_id(0)

    @pl.when(k == 0)
    def _init():
        pooled_ref[...] = jnp.zeros_like(pooled_ref)

    # one-hot (exact) pool accumulation in f32
    pooled_ref[...] += jnp.dot(pool_ref[...].astype(jnp.float32), h_ref[...],
                               preferred_element_type=jnp.float32)

    @pl.when(k == pl.num_programs(0) - 1)
    def _finalize():
        y = pooled_ref[...] * invc_ref[...]                      # mean pool
        y = _softplus(jnp.dot(y, w1_ref[...],
                              preferred_element_type=jnp.float32) + b1_ref[...])
        y = _softplus(jnp.dot(y, w2_ref[...],
                              preferred_element_type=jnp.float32) + b2_ref[...])
        o_ref[...] = (jnp.dot(y, wo_ref[...],
                              preferred_element_type=jnp.float32) + bo_ref[...])


def head(pool_onehot, h_pad, inv_cnt, w1, b1, w2, b2, wo, bo, *, tile_n):
    g, n_pad = pool_onehot.shape
    c = h_pad.shape[1]
    t = wo.shape[1]
    return pl.pallas_call(
        _head_kernel,
        out_shape=jax.ShapeDtypeStruct((g, t), jnp.float32),
        grid_spec=pltpu.PrefetchScalarGridSpec(
            num_scalar_prefetch=0,
            grid=(n_pad // tile_n,),
            in_specs=[
                pl.BlockSpec((g, tile_n), lambda k: (0, k)),
                pl.BlockSpec((tile_n, c), lambda k: (k, 0)),
                pl.BlockSpec((g, 1), lambda k: (0, 0)),
                pl.BlockSpec((c, c), lambda k: (0, 0)),
                pl.BlockSpec((1, c), lambda k: (0, 0)),
                pl.BlockSpec((c, c), lambda k: (0, 0)),
                pl.BlockSpec((1, c), lambda k: (0, 0)),
                pl.BlockSpec((c, t), lambda k: (0, 0)),
                pl.BlockSpec((1, t), lambda k: (0, 0)),
            ],
            out_specs=pl.BlockSpec((g, t), lambda k: (0, 0)),
            scratch_shapes=[pltpu.VMEM((g, c), jnp.float32)],
        ),
        compiler_params=pltpu.CompilerParams(
            dimension_semantics=("arbitrary",)),
    )(pool_onehot, h_pad, inv_cnt,
      w1, b1.reshape(1, -1), w2, b2.reshape(1, -1), wo, bo.reshape(1, -1))


# ---------------------------------------------------------------------------
# Parameter init (deterministic, PyTorch-Linear-style uniform)
# ---------------------------------------------------------------------------
def _linear_params(key, fan_in, fan_out):
    kw, kb = jax.random.split(key)
    bound = float(fan_in) ** -0.5
    w = jax.random.uniform(kw, (fan_in, fan_out), jnp.float32, -bound, bound)
    b = jax.random.uniform(kb, (fan_out,), jnp.float32, -bound, bound)
    return w, b


def init_params(key, orig_atom_fea_len=92, nbr_fea_len=41, atom_fea_len=64,
                n_conv=3, num_task=1):
    c = atom_fea_len
    keys = jax.random.split(key, n_conv + 5)
    params = {
        "emb1": _linear_params(keys[0], orig_atom_fea_len, c),
        "emb2": _linear_params(keys[1], nbr_fea_len, c),
    }
    convs = []
    for i in range(n_conv):
        kf, ks = jax.random.split(keys[2 + i])
        wf, bf = _linear_params(kf, 3 * c, c)       # lin_f
        ws, bs = _linear_params(ks, 3 * c, c)       # lin_s
        # fuse lin_f | lin_s -> [3C, 2C], split row-wise for the x_i/x_j/e parts
        w_fused = jnp.concatenate([wf, ws], axis=1)
        b_fused = jnp.concatenate([bf, bs]).reshape(1, -1)
        w_dst = w_fused[:c].astype(C_DTYPE)
        w_src = w_fused[c:2 * c].astype(C_DTYPE)
        w_e = w_fused[2 * c:].astype(C_DTYPE)
        gamma = jnp.ones((1, c), jnp.float32)
        beta = jnp.zeros((1, c), jnp.float32)
        convs.append((w_dst, w_src, w_e, b_fused, gamma, beta))
    params["convs"] = convs
    params["lin1"] = _linear_params(keys[2 + n_conv], c, c)
    params["lin2"] = _linear_params(keys[3 + n_conv], c, c)
    params["out"] = _linear_params(keys[4 + n_conv], c, num_task)
    return params


# ---------------------------------------------------------------------------
# Full forward pass (index glue in XLA, hot paths in Pallas kernels)
# ---------------------------------------------------------------------------
def cgcnn_pred_forward(params, x, edge_index, edge_attr, batch, num_graphs):
    n = x.shape[0]
    e = edge_attr.shape[0]

    tile_n, n_pad = _row_tiling(n)
    tile_e, e_pad = _row_tiling(e)

    src = edge_index[0]                  # x_j (source)
    dst = edge_index[1]                  # x_i (target / aggregation index)
    src_p = jnp.pad(src, (0, e_pad - e), constant_values=0)
    dst_p = jnp.pad(dst, (0, e_pad - e), constant_values=0)
    dst_scat = jnp.pad(dst, (0, e_pad - e), constant_values=-1)   # pad -> no hit

    x_p = jnp.pad(x, ((0, n_pad - n), (0, 0)))
    ea_p = jnp.pad(edge_attr, ((0, e_pad - e), (0, 0)))

    # embeddings (Pallas, row-tiled, f32)
    h = linear(x_p, *params["emb1"], tile_r=tile_n)               # [n_pad, C]
    e_emb = linear(ea_p, *params["emb2"], tile_r=tile_e)          # [e_pad, C]
    e_emb_bf = e_emb.astype(C_DTYPE)

    # one-hot scatter-add matrix [n_pad, e_pad], bf16 (0/1 exact), built once
    scat = (dst_scat[None, :] == jnp.arange(n_pad)[:, None]).astype(C_DTYPE)

    n_conv = len(params["convs"])
    for i, (w_dst, w_src, w_e, bias, gamma, beta) in enumerate(params["convs"]):
        h_dst = h[dst_p].astype(C_DTYPE)          # gather glue (XLA)
        h_src = h[src_p].astype(C_DTYPE)
        h = cgconv_bn(h_dst, h_src, e_emb_bf, w_dst, w_src, w_e, bias,
                      scat, h, gamma, beta,
                      n_real=n, apply_relu=(i != n_conv - 1), tile_e=tile_e)

    # JK == 'last' -> node representation is the final h

    # global mean pool: exact bf16 one-hot, f32 reciprocal counts applied after
    batch_p = jnp.pad(batch, (0, n_pad - n), constant_values=-1)
    onehot = batch_p[None, :] == jnp.arange(num_graphs)[:, None]
    counts = jnp.maximum(jnp.sum(onehot, axis=1).astype(jnp.float32), 1.0)
    inv_cnt = (1.0 / counts).reshape(-1, 1)

    y = head(onehot.astype(C_DTYPE), h, inv_cnt,
             params["lin1"][0], params["lin1"][1],
             params["lin2"][0], params["lin2"][1],
             params["out"][0], params["out"][1],
             tile_n=tile_n)                                       # [G, num_task]
    return jnp.squeeze(y)                                         # matches .squeeze()


if __name__ == "__main__":
    key = jax.random.PRNGKey(0)
    k_param, k_x, k_e, k_ei = jax.random.split(key, 4)

    N, E, G = 16, 32, 2
    ORIG_ATOM_FEA, NBR_FEA = 92, 41

    params = init_params(k_param)

    x = jax.random.normal(k_x, (N, ORIG_ATOM_FEA), jnp.float32)
    edge_attr = jax.random.normal(k_e, (E, NBR_FEA), jnp.float32)

    # nodes 0..7 -> graph 0, 8..15 -> graph 1; edges stay within their graph
    src0 = jax.random.randint(jax.random.fold_in(k_ei, 0), (E // 2,), 0, N // 2)
    dst0 = jax.random.randint(jax.random.fold_in(k_ei, 1), (E // 2,), 0, N // 2)
    src1 = jax.random.randint(jax.random.fold_in(k_ei, 2), (E // 2,), N // 2, N)
    dst1 = jax.random.randint(jax.random.fold_in(k_ei, 3), (E // 2,), N // 2, N)
    edge_index = jnp.stack([jnp.concatenate([src0, src1]),
                            jnp.concatenate([dst0, dst1])], axis=0)
    batch = jnp.concatenate([jnp.zeros((N // 2,), jnp.int32),
                             jnp.ones((N // 2,), jnp.int32)])

    fwd = jax.jit(functools.partial(cgcnn_pred_forward, num_graphs=G))
    y = fwd(params, x, edge_index, edge_attr, batch)
    y = jax.block_until_ready(y)
    assert y.shape == (G,), y.shape
    print("KERNEL_OK")
</pallas_src>

<mosaic_0001>
module attributes {stable_mosaic.version = 11 : i64} {
  func.func @_linear_kernel(%arg0: i32, %arg1: memref<16x92xf32, #tpu.memory_space<vmem>>, %arg2: memref<92x64xf32, #tpu.memory_space<vmem>>, %arg3: memref<1x64xf32, #tpu.memory_space<vmem>>, %arg4: memref<16x64xf32, #tpu.memory_space<vmem>>) attributes {dimension_semantics = [#tpu.dimension_semantics<parallel>], iteration_bounds = array<i64: 1>, scalar_prefetch = 0 : i64, scratch_operands = 0 : i64, tpu.core_type = #tpu.core_type<tc>, window_params = [{transform_indices = @transform_0, window_bounds = array<i64: 16, 92>}, {pipeline_mode = #tpu.pipeline_mode<synchronous>, transform_indices = @transform_1, window_bounds = array<i64: 92, 64>}, {pipeline_mode = #tpu.pipeline_mode<synchronous>, transform_indices = @transform_2, window_bounds = array<i64: 1, 64>}, {transform_indices = @transform_3, window_bounds = array<i64: 16, 64>}]} {
    %c0 = arith.constant 0 : index
    %c0_0 = arith.constant 0 : index
    %0 = vector.load %arg1[%c0, %c0_0] : memref<16x92xf32, #tpu.memory_space<vmem>>, vector<16x92xf32>
    %c0_1 = arith.constant 0 : index
    %c0_2 = arith.constant 0 : index
    %1 = vector.load %arg2[%c0_1, %c0_2] : memref<92x64xf32, #tpu.memory_space<vmem>>, vector<92x64xf32>
    %cst = arith.constant dense<0.000000e+00> : vector<16x64xf32>
    %2 = tpu.matmul %0, %1, %cst {dimension_numbers = #tpu.dot_dimension_numbers<[1], [0], [0], [1], [0, 0, 1, 1], [], []>} : vector<16x92xf32>, vector<92x64xf32>, vector<16x64xf32> -> vector<16x64xf32>
    %c0_3 = arith.constant 0 : index
    %c0_4 = arith.constant 0 : index
    %3 = vector.load %arg3[%c0_3, %c0_4] : memref<1x64xf32, #tpu.memory_space<vmem>>, vector<1x64xf32>
    %4 = vector.broadcast %3 : vector<1x64xf32> to vector<16x64xf32>
    %5 = arith.addf %2, %4 : vector<16x64xf32>
    %c0_5 = arith.constant 0 : index
    %c0_6 = arith.constant 0 : index
    %6 = vector.load %arg4[%c0_5, %c0_6] : memref<16x64xf32, #tpu.memory_space<vmem>>, vector<16x64xf32>
    tpu.vector_store %arg4[%c0_5, %c0_6], %5 {strides = array<i32>} : memref<16x64xf32, #tpu.memory_space<vmem>>, vector<16x64xf32>,
    return
  }
  func.func @transform_0(%arg0: i32) -> (i32, i32) {
    %c0_i32 = arith.constant 0 : i32
    %c0_i32_0 = arith.constant 0 : i32
    return %arg0, %c0_i32 : i32, i32
  }
  func.func @transform_1(%arg0: i32) -> (i32, i32) {
    %c0_i32 = arith.constant 0 : i32
    %c0_i32_0 = arith.constant 0 : i32
    %c0_i32_1 = arith.constant 0 : i32
    return %c0_i32, %c0_i32_0 : i32, i32
  }
  func.func @transform_2(%arg0: i32) -> (i32, i32) {
    %c0_i32 = arith.constant 0 : i32
    %c0_i32_0 = arith.constant 0 : i32
    %c0_i32_1 = arith.constant 0 : i32
    return %c0_i32, %c0_i32_0 : i32, i32
  }
  func.func @transform_3(%arg0: i32) -> (i32, i32) {
    %c0_i32 = arith.constant 0 : i32
    %c0_i32_0 = arith.constant 0 : i32
    return %arg0, %c0_i32 : i32, i32
  }
}

module attributes {stable_mosaic.version = 11 : i64} {
  func.func @_conv_bn_kernel(%arg0: i32, %arg1: memref<32x64xbf16, #tpu.memory_space<vmem>>, %arg2: memref<32x64xbf16, #tpu.memory_space<vmem>>, %arg3: memref<32x64xbf16, #tpu.memory_space<vmem>>, %arg4: memref<64x128xbf16, #tpu.memory_space<vmem>>, %arg5: memref<64x128xbf16, #tpu.memory_space<vmem>>, %arg6: memref<64x128xbf16, #tpu.memory_space<vmem>>, %arg7: memref<1x128xf32, #tpu.memory_space<vmem>>, %arg8: memref<16x32xbf16, #tpu.memory_space<vmem>>, %arg9: memref<16x64xf32, #tpu.memory_space<vmem>>, %arg10: memref<1x64xf32, #tpu.memory_space<vmem>>, %arg11: memref<1x64xf32, #tpu.memory_space<vmem>>, %arg12: memref<16x64xf32, #tpu.memory_space<vmem>>) attributes {dimension_semantics = [#tpu.dimension_semantics<arbitrary>], iteration_bounds = array<i64: 1>, scalar_prefetch = 0 : i64, scratch_operands = 0 : i64, tpu.core_type = #tpu.core_type<tc>, window_params = [{transform_indices = @transform_0, window_bounds = array<i64: 32, 64>}, {transform_indices = @transform_1, window_bounds = array<i64: 32, 64>}, {transform_indices = @transform_2, window_bounds = array<i64: 32, 64>}, {pipeline_mode = #tpu.pipeline_mode<synchronous>, transform_indices = @transform_3, window_bounds = array<i64: 64, 128>}, {pipeline_mode = #tpu.pipeline_mode<synchronous>, transform_indices = @transform_4, window_bounds = array<i64: 64, 128>}, {pipeline_mode = #tpu.pipeline_mode<synchronous>, transform_indices = @transform_5, window_bounds = array<i64: 64, 128>}, {pipeline_mode = #tpu.pipeline_mode<synchronous>, transform_indices = @transform_6, window_bounds = array<i64: 1, 128>}, {transform_indices = @transform_7, window_bounds = array<i64: 16, 32>}, {pipeline_mode = #tpu.pipeline_mode<synchronous>, transform_indices = @transform_8, window_bounds = array<i64: 16, 64>}, {pipeline_mode = #tpu.pipeline_mode<synchronous>, transform_indices = @transform_9, window_bounds = array<i64: 1, 64>}, {pipeline_mode = #tpu.pipeline_mode<synchronous>, transform_indices = @transform_10, window_bounds = array<i64: 1, 64>}, {pipeline_mode = #tpu.pipeline_mode<synchronous>, transform_indices = @transform_11, window_bounds = array<i64: 16, 64>}]} {
    %c0_i32 = arith.constant 0 : i32
    %0 = arith.cmpi eq, %arg0, %c0_i32 : i32
    %1 = arith.extui %0 : i1 to i32
    %c0_i32_0 = arith.constant 0 : i32
    %2 = arith.cmpi ne, %1, %c0_i32_0 : i32
    scf.if %2 {
      %cst_28 = arith.constant 0.000000e+00 : f32
      %42 = vector.broadcast %cst_28 : f32 to vector<16x64xf32>
      %c0_29 = arith.constant 0 : index
      %c0_30 = arith.constant 0 : index
      %43 = vector.load %arg12[%c0_29, %c0_30] : memref<16x64xf32, #tpu.memory_space<vmem>>, vector<16x64xf32>
      tpu.vector_store %arg12[%c0_29, %c0_30], %42 {strides = array<i32>} : memref<16x64xf32, #tpu.memory_space<vmem>>, vector<16x64xf32>,
    } else {
    }
    %c0 = arith.constant 0 : index
    %c0_1 = arith.constant 0 : index
    %3 = vector.load %arg1[%c0, %c0_1] : memref<32x64xbf16, #tpu.memory_space<vmem>>, vector<32x64xbf16>
    %c0_2 = arith.constant 0 : index
    %c0_3 = arith.constant 0 : index
    %4 = vector.load %arg4[%c0_2, %c0_3] : memref<64x128xbf16, #tpu.memory_space<vmem>>, vector<64x128xbf16>
    %cst = arith.constant dense<0.000000e+00> : vector<32x128xf32>
    %5 = tpu.matmul %3, %4, %cst {dimension_numbers = #tpu.dot_dimension_numbers<[1], [0], [0], [1], [0, 0, 1, 1], [], []>} : vector<32x64xbf16>, vector<64x128xbf16>, vector<32x128xf32> -> vector<32x128xf32>
    %c0_4 = arith.constant 0 : index
    %c0_5 = arith.constant 0 : index
    %6 = vector.load %arg2[%c0_4, %c0_5] : memref<32x64xbf16, #tpu.memory_space<vmem>>, vector<32x64xbf16>
    %c0_6 = arith.constant 0 : index
    %c0_7 = arith.constant 0 : index
    %7 = vector.load %arg5[%c0_6, %c0_7] : memref<64x128xbf16, #tpu.memory_space<vmem>>, vector<64x128xbf16>
    %cst_8 = arith.constant dense<0.000000e+00> : vector<32x128xf32>
    %8 = tpu.matmul %6, %7, %cst_8 {dimension_numbers = #tpu.dot_dimension_numbers<[1], [0], [0], [1], [0, 0, 1, 1], [], []>} : vector<32x64xbf16>, vector<64x128xbf16>, vector<32x128xf32> -> vector<32x128xf32>
    %9 = arith.addf %5, %8 : vector<32x128xf32>
    %c0_9 = arith.constant 0 : index
    %c0_10 = arith.constant 0 : index
    %10 = vector.load %arg3[%c0_9, %c0_10] : memref<32x64xbf16, #tpu.memory_space<vmem>>, vector<32x64xbf16>
    %c0_11 = arith.constant 0 : index
    %c0_12 = arith.constant 0 : index
    %11 = vector.load %arg6[%c0_11, %c0_12] : memref<64x128xbf16, #tpu.memory_space<vmem>>, vector<64x128xbf16>
    %cst_13 = arith.constant dense<0.000000e+00> : vector<32x128xf32>
    %12 = tpu.matmul %10, %11, %cst_13 {dimension_numbers = #tpu.dot_dimension_numbers<[1], [0], [0], [1], [0, 0, 1, 1], [], []>} : vector<32x64xbf16>, vector<64x128xbf16>, vector<32x128xf32> -> vector<32x128xf32>
    %13 = arith.addf %9, %12 : vector<32x128xf32>
    %c0_14 = arith.constant 0 : index
    %c0_15 = arith.constant 0 : index
    %14 = vector.load %arg7[%c0_14, %c0_15] : memref<1x128xf32, #tpu.memory_space<vmem>>, vector<1x128xf32>
    %15 = vector.broadcast %14 : vector<1x128xf32> to vector<32x128xf32>
    %16 = arith.addf %13, %15 : vector<32x128xf32>
    %17 = vector.extract_strided_slice %16 {offsets = [0, 0], sizes = [32, 64], strides = [1, 1]} : vector<32x128xf32> to vector<32x64xf32>
    %18 = arith.negf %17 : vector<32x64xf32>
    %19 = math.exp %18 : vector<32x64xf32>
    %cst_16 = arith.constant 1.000000e+00 : f32
    %20 = vector.broadcast %cst_16 : f32 to vector<32x64xf32>
    %21 = arith.addf %20, %19 : vector<32x64xf32>
    %22 = arith.divf %20, %21 : vector<32x64xf32>
    %23 = vector.extract_strided_slice %16 {offsets = [0, 64], sizes = [32, 64], strides = [1, 1]} : vector<32x128xf32> to vector<32x64xf32>
    %cst_17 = arith.constant 0.000000e+00 : f32
    %24 = vector.broadcast %cst_17 : f32 to vector<32x64xf32>
    %25 = arith.maximumf %23, %24 : vector<32x64xf32>
    %26 = math.absf %23 : vector<32x64xf32>
    %cst_18 = arith.constant 0.000000e+00 : f32
    %27 = vector.broadcast %cst_18 : f32 to vector<32x64xf32>
    %28 = arith.subf %27, %26 : vector<32x64xf32>
    %29 = math.exp %28 : vector<32x64xf32>
    %30 = math.log1p %29 : vector<32x64xf32>
    %31 = arith.addf %25, %30 : vector<32x64xf32>
    %32 = arith.mulf %22, %31 : vector<32x64xf32>
    %c0_19 = arith.constant 0 : index
    %c0_20 = arith.constant 0 : index
    %33 = vector.load %arg12[%c0_19, %c0_20] : memref<16x64xf32, #tpu.memory_space<vmem>>, vector<16x64xf32>
    %c0_21 = arith.constant 0 : index
    %c0_22 = arith.constant 0 : index
    %34 = vector.load %arg8[%c0_21, %c0_22] : memref<16x32xbf16, #tpu.memory_space<vmem>>, vector<16x32xbf16>
    %35 = arith.truncf %32 : vector<32x64xf32> to vector<32x64xbf16>
    %cst_23 = arith.constant dense<0.000000e+00> : vector<16x64xf32>
    %36 = tpu.matmul %34, %35, %cst_23 {dimension_numbers = #tpu.dot_dimension_numbers<[1], [0], [0], [1], [0, 0, 1, 1], [], []>} : vector<16x32xbf16>, vector<32x64xbf16>, vector<16x64xf32> -> vector<16x64xf32>
    %37 = arith.addf %33, %36 : vector<16x64xf32>
    %c0_24 = arith.constant 0 : index
    %c0_25 = arith.constant 0 : index
    %38 = vector.load %arg12[%c0_24, %c0_25] : memref<16x64xf32, #tpu.memory_space<vmem>>, vector<16x64xf32>
    tpu.vector_store %arg12[%c0_24, %c0_25], %37 {strides = array<i32>} : memref<16x64xf32, #tpu.memory_space<vmem>>, vector<16x64xf32>,
    %c0_i32_26 = arith.constant 0 : i32
    %39 = arith.cmpi eq, %arg0, %c0_i32_26 : i32
    %40 = arith.extui %39 : i1 to i32
    %c0_i32_27 = arith.constant 0 : i32
    %41 = arith.cmpi ne, %40, %c0_i32_27 : i32
    scf.if %41 {
      %c0_28 = arith.constant 0 : index
      %c0_29 = arith.constant 0 : index
      %42 = vector.load %arg12[%c0_28, %c0_29] : memref<16x64xf32, #tpu.memory_space<vmem>>, vector<16x64xf32>
      %c0_30 = arith.constant 0 : index
      %c0_31 = arith.constant 0 : index
      %43 = vector.load %arg9[%c0_30, %c0_31] : memref<16x64xf32, #tpu.memory_space<vmem>>, vector<16x64xf32>
      %44 = arith.addf %42, %43 : vector<16x64xf32>
      %45 = tpu.iota {dimensions = array<i32: 0>} : vector<16x64xi32>
      %c16_i32 = arith.constant 16 : i32
      %46 = vector.broadcast %c16_i32 : i32 to vector<16x64xi32>
      %47 = arith.cmpi slt, %45, %46 : vector<16x64xi32>
      %cst_32 = arith.constant 0.000000e+00 : f32
      %48 = vector.broadcast %cst_32 : f32 to vector<16x64xf32>
      %49 = arith.select %47, %44, %48 : vector<16x64xi1>, vector<16x64xf32>
      %cst_33 = arith.constant dense<0.000000e+00> : vector<64xf32>
      %50 = vector.multi_reduction <add>, %49, %cst_33 [0] : vector<16x64xf32> to vector<64xf32>
      %51 = vector.shape_cast %50 : vector<64xf32> to vector<1x64xf32>
      %cst_34 = arith.constant 6.250000e-02 : f32
      %52 = vector.broadcast %cst_34 : f32 to vector<1x64xf32>
      %53 = arith.mulf %51, %52 : vector<1x64xf32>
      %54 = vector.broadcast %53 : vector<1x64xf32> to vector<16x64xf32>
      %55 = arith.subf %44, %54 : vector<16x64xf32>
      %56 = arith.mulf %55, %55 : vector<16x64xf32>
      %cst_35 = arith.constant 0.000000e+00 : f32
      %57 = vector.broadcast %cst_35 : f32 to vector<16x64xf32>
      %58 = arith.select %47, %56, %57 : vector<16x64xi1>, vector<16x64xf32>
      %cst_36 = arith.constant dense<0.000000e+00> : vector<64xf32>
      %59 = vector.multi_reduction <add>, %58, %cst_36 [0] : vector<16x64xf32> to vector<64xf32>
      %60 = vector.shape_cast %59 : vector<64xf32> to vector<1x64xf32>
      %cst_37 = arith.constant 6.250000e-02 : f32
      %61 = vector.broadcast %cst_37 : f32 to vector<1x64xf32>
      %62 = arith.mulf %60, %61 : vector<1x64xf32>
      %63 = vector.broadcast %53 : vector<1x64xf32> to vector<16x64xf32>
      %64 = arith.subf %44, %63 : vector<16x64xf32>
      %cst_38 = arith.constant 9.99999974E-6 : f32
      %65 = vector.broadcast %cst_38 : f32 to vector<1x64xf32>
      %66 = arith.addf %62, %65 : vector<1x64xf32>
      %67 = math.rsqrt %66 : vector<1x64xf32>
      %68 = vector.broadcast %67 : vector<1x64xf32> to vector<16x64xf32>
      %69 = arith.mulf %64, %68 : vector<16x64xf32>
      %c0_39 = arith.constant 0 : index
      %c0_40 = arith.constant 0 : index
      %70 = vector.load %arg10[%c0_39, %c0_40] : memref<1x64xf32, #tpu.memory_space<vmem>>, vector<1x64xf32>
      %71 = vector.broadcast %70 : vector<1x64xf32> to vector<16x64xf32>
      %72 = arith.mulf %69, %71 : vector<16x64xf32>
      %c0_41 = arith.constant 0 : index
      %c0_42 = arith.constant 0 : index
      %73 = vector.load %arg11[%c0_41, %c0_42] : memref<1x64xf32, #tpu.memory_space<vmem>>, vector<1x64xf32>
      %74 = vector.broadcast %73 : vector<1x64xf32> to vector<16x64xf32>
      %75 = arith.addf %72, %74 : vector<16x64xf32>
      %c0_43 = arith.constant 0 : index
      %c0_44 = arith.constant 0 : index
      %76 = vector.load %arg12[%c0_43, %c0_44] : memref<16x64xf32, #tpu.memory_space<vmem>>, vector<16x64xf32>
      tpu.vector_store %arg12[%c0_43, %c0_44], %75 {strides = array<i32>} : memref<16x64xf32, #tpu.memory_space<vmem>>, vector<16x64xf32>,
    } else {
    }
    return
  }
  func.func @transform_0(%arg0: i32) -> (i32, i32) {
    %c0_i32 = arith.constant 0 : i32
    %c0_i32_0 = arith.constant 0 : i32
    return %arg0, %c0_i32 : i32, i32
  }
  func.func @transform_1(%arg0: i32) -> (i32, i32) {
    %c0_i32 = arith.constant 0 : i32
    %c0_i32_0 = arith.constant 0 : i32
    return %arg0, %c0_i32 : i32, i32
  }
  func.func @transform_2(%arg0: i32) -> (i32, i32) {
    %c0_i32 = arith.constant 0 : i32
    %c0_i32_0 = arith.constant 0 : i32
    return %arg0, %c0_i32 : i32, i32
  }
  func.func @transform_3(%arg0: i32) -> (i32, i32) {
    %c0_i32 = arith.constant 0 : i32
    %c0_i32_0 = arith.constant 0 : i32
    %c0_i32_1 = arith.constant 0 : i32
    return %c0_i32, %c0_i32_0 : i32, i32
  }
  func.func @transform_4(%arg0: i32) -> (i32, i32) {
    %c0_i32 = arith.constant 0 : i32
    %c0_i32_0 = arith.constant 0 : i32
    %c0_i32_1 = arith.constant 0 : i32
    return %c0_i32, %c0_i32_0 : i32, i32
  }
  func.func @transform_5(%arg0: i32) -> (i32, i32) {
    %c0_i32 = arith.constant 0 : i32
    %c0_i32_0 = arith.constant 0 : i32
    %c0_i32_1 = arith.constant 0 : i32
    return %c0_i32, %c0_i32_0 : i32, i32
  }
  func.func @transform_6(%arg0: i32) -> (i32, i32) {
    %c0_i32 = arith.constant 0 : i32
    %c0_i32_0 = arith.constant 0 : i32
    %c0_i32_1 = arith.constant 0 : i32
    return %c0_i32, %c0_i32_0 : i32, i32
  }
  func.func @transform_7(%arg0: i32) -> (i32, i32) {
    %c0_i32 = arith.constant 0 : i32
    %c0_i32_0 = arith.constant 0 : i32
    return %c0_i32, %arg0 : i32, i32
  }
  func.func @transform_8(%arg0: i32) -> (i32, i32) {
    %c0_i32 = arith.constant 0 : i32
    %c0_i32_0 = arith.constant 0 : i32
    %c0_i32_1 = arith.constant 0 : i32
    return %c0_i32, %c0_i32_0 : i32, i32
  }
  func.func @transform_9(%arg0: i32) -> (i32, i32) {
    %c0_i32 = arith.constant 0 : i32
    %c0_i32_0 = arith.constant 0 : i32
    %c0_i32_1 = arith.constant 0 : i32
    return %c0_i32, %c0_i32_0 : i32, i32
  }
  func.func @transform_10(%arg0: i32) -> (i32, i32) {
    %c0_i32 = arith.constant 0 : i32
    %c0_i32_0 = arith.constant 0 : i32
    %c0_i32_1 = arith.constant 0 : i32
    return %c0_i32, %c0_i32_0 : i32, i32
  }
  func.func @transform_11(%arg0: i32) -> (i32, i32) {
    %c0_i32 = arith.constant 0 : i32
    %c0_i32_0 = arith.constant 0 : i32
    %c0_i32_1 = arith.constant 0 : i32
    return %c0_i32, %c0_i32_0 : i32, i32
  }
}

module attributes {stable_mosaic.version = 11 : i64} {
  func.func @_linear_kernel(%arg0: i32, %arg1: memref<32x41xf32, #tpu.memory_space<vmem>>, %arg2: memref<41x64xf32, #tpu.memory_space<vmem>>, %arg3: memref<1x64xf32, #tpu.memory_space<vmem>>, %arg4: memref<32x64xf32, #tpu.memory_space<vmem>>) attributes {dimension_semantics = [#tpu.dimension_semantics<parallel>], iteration_bounds = array<i64: 1>, scalar_prefetch = 0 : i64, scratch_operands = 0 : i64, tpu.core_type = #tpu.core_type<tc>, window_params = [{transform_indices = @transform_0, window_bounds = array<i64: 32, 41>}, {pipeline_mode = #tpu.pipeline_mode<synchronous>, transform_indices = @transform_1, window_bounds = array<i64: 41, 64>}, {pipeline_mode = #tpu.pipeline_mode<synchronous>, transform_indices = @transform_2, window_bounds = array<i64: 1, 64>}, {transform_indices = @transform_3, window_bounds = array<i64: 32, 64>}]} {
    %c0 = arith.constant 0 : index
    %c0_0 = arith.constant 0 : index
    %0 = vector.load %arg1[%c0, %c0_0] : memref<32x41xf32, #tpu.memory_space<vmem>>, vector<32x41xf32>
    %c0_1 = arith.constant 0 : index
    %c0_2 = arith.constant 0 : index
    %1 = vector.load %arg2[%c0_1, %c0_2] : memref<41x64xf32, #tpu.memory_space<vmem>>, vector<41x64xf32>
    %cst = arith.constant dense<0.000000e+00> : vector<32x64xf32>
    %2 = tpu.matmul %0, %1, %cst {dimension_numbers = #tpu.dot_dimension_numbers<[1], [0], [0], [1], [0, 0, 1, 1], [], []>} : vector<32x41xf32>, vector<41x64xf32>, vector<32x64xf32> -> vector<32x64xf32>
    %c0_3 = arith.constant 0 : index
    %c0_4 = arith.constant 0 : index
    %3 = vector.load %arg3[%c0_3, %c0_4] : memref<1x64xf32, #tpu.memory_space<vmem>>, vector<1x64xf32>
    %4 = vector.broadcast %3 : vector<1x64xf32> to vector<32x64xf32>
    %5 = arith.addf %2, %4 : vector<32x64xf32>
    %c0_5 = arith.constant 0 : index
    %c0_6 = arith.constant 0 : index
    %6 = vector.load %arg4[%c0_5, %c0_6] : memref<32x64xf32, #tpu.memory_space<vmem>>, vector<32x64xf32>
    tpu.vector_store %arg4[%c0_5, %c0_6], %5 {strides = array<i32>} : memref<32x64xf32, #tpu.memory_space<vmem>>, vector<32x64xf32>,
    return
  }
  func.func @transform_0(%arg0: i32) -> (i32, i32) {
    %c0_i32 = arith.constant 0 : i32
    %c0_i32_0 = arith.constant 0 : i32
    return %arg0, %c0_i32 : i32, i32
  }
  func.func @transform_1(%arg0: i32) -> (i32, i32) {
    %c0_i32 = arith.constant 0 : i32
    %c0_i32_0 = arith.constant 0 : i32
    %c0_i32_1 = arith.constant 0 : i32
    return %c0_i32, %c0_i32_0 : i32, i32
  }
  func.func @transform_2(%arg0: i32) -> (i32, i32) {
    %c0_i32 = arith.constant 0 : i32
    %c0_i32_0 = arith.constant 0 : i32
    %c0_i32_1 = arith.constant 0 : i32
    return %c0_i32, %c0_i32_0 : i32, i32
  }
  func.func @transform_3(%arg0: i32) -> (i32, i32) {
    %c0_i32 = arith.constant 0 : i32
    %c0_i32_0 = arith.constant 0 : i32
    return %arg0, %c0_i32 : i32, i32
  }
}

module attributes {stable_mosaic.version = 11 : i64} {
  func.func @_conv_bn_kernel(%arg0: i32, %arg1: memref<32x64xbf16, #tpu.memory_space<vmem>>, %arg2: memref<32x64xbf16, #tpu.memory_space<vmem>>, %arg3: memref<32x64xbf16, #tpu.memory_space<vmem>>, %arg4: memref<64x128xbf16, #tpu.memory_space<vmem>>, %arg5: memref<64x128xbf16, #tpu.memory_space<vmem>>, %arg6: memref<64x128xbf16, #tpu.memory_space<vmem>>, %arg7: memref<1x128xf32, #tpu.memory_space<vmem>>, %arg8: memref<16x32xbf16, #tpu.memory_space<vmem>>, %arg9: memref<16x64xf32, #tpu.memory_space<vmem>>, %arg10: memref<1x64xf32, #tpu.memory_space<vmem>>, %arg11: memref<1x64xf32, #tpu.memory_space<vmem>>, %arg12: memref<16x64xf32, #tpu.memory_space<vmem>>) attributes {dimension_semantics = [#tpu.dimension_semantics<arbitrary>], iteration_bounds = array<i64: 1>, scalar_prefetch = 0 : i64, scratch_operands = 0 : i64, tpu.core_type = #tpu.core_type<tc>, window_params = [{transform_indices = @transform_0, window_bounds = array<i64: 32, 64>}, {transform_indices = @transform_1, window_bounds = array<i64: 32, 64>}, {transform_indices = @transform_2, window_bounds = array<i64: 32, 64>}, {pipeline_mode = #tpu.pipeline_mode<synchronous>, transform_indices = @transform_3, window_bounds = array<i64: 64, 128>}, {pipeline_mode = #tpu.pipeline_mode<synchronous>, transform_indices = @transform_4, window_bounds = array<i64: 64, 128>}, {pipeline_mode = #tpu.pipeline_mode<synchronous>, transform_indices = @transform_5, window_bounds = array<i64: 64, 128>}, {pipeline_mode = #tpu.pipeline_mode<synchronous>, transform_indices = @transform_6, window_bounds = array<i64: 1, 128>}, {transform_indices = @transform_7, window_bounds = array<i64: 16, 32>}, {pipeline_mode = #tpu.pipeline_mode<synchronous>, transform_indices = @transform_8, window_bounds = array<i64: 16, 64>}, {pipeline_mode = #tpu.pipeline_mode<synchronous>, transform_indices = @transform_9, window_bounds = array<i64: 1, 64>}, {pipeline_mode = #tpu.pipeline_mode<synchronous>, transform_indices = @transform_10, window_bounds = array<i64: 1, 64>}, {pipeline_mode = #tpu.pipeline_mode<synchronous>, transform_indices = @transform_11, window_bounds = array<i64: 16, 64>}]} {
    %c0_i32 = arith.constant 0 : i32
    %0 = arith.cmpi eq, %arg0, %c0_i32 : i32
    %1 = arith.extui %0 : i1 to i32
    %c0_i32_0 = arith.constant 0 : i32
    %2 = arith.cmpi ne, %1, %c0_i32_0 : i32
    scf.if %2 {
      %cst_28 = arith.constant 0.000000e+00 : f32
      %42 = vector.broadcast %cst_28 : f32 to vector<16x64xf32>
      %c0_29 = arith.constant 0 : index
      %c0_30 = arith.constant 0 : index
      %43 = vector.load %arg12[%c0_29, %c0_30] : memref<16x64xf32, #tpu.memory_space<vmem>>, vector<16x64xf32>
      tpu.vector_store %arg12[%c0_29, %c0_30], %42 {strides = array<i32>} : memref<16x64xf32, #tpu.memory_space<vmem>>, vector<16x64xf32>,
    } else {
    }
    %c0 = arith.constant 0 : index
    %c0_1 = arith.constant 0 : index
    %3 = vector.load %arg1[%c0, %c0_1] : memref<32x64xbf16, #tpu.memory_space<vmem>>, vector<32x64xbf16>
    %c0_2 = arith.constant 0 : index
    %c0_3 = arith.constant 0 : index
    %4 = vector.load %arg4[%c0_2, %c0_3] : memref<64x128xbf16, #tpu.memory_space<vmem>>, vector<64x128xbf16>
    %cst = arith.constant dense<0.000000e+00> : vector<32x128xf32>
    %5 = tpu.matmul %3, %4, %cst {dimension_numbers = #tpu.dot_dimension_numbers<[1], [0], [0], [1], [0, 0, 1, 1], [], []>} : vector<32x64xbf16>, vector<64x128xbf16>, vector<32x128xf32> -> vector<32x128xf32>
    %c0_4 = arith.constant 0 : index
    %c0_5 = arith.constant 0 : index
    %6 = vector.load %arg2[%c0_4, %c0_5] : memref<32x64xbf16, #tpu.memory_space<vmem>>, vector<32x64xbf16>
    %c0_6 = arith.constant 0 : index
    %c0_7 = arith.constant 0 : index
    %7 = vector.load %arg5[%c0_6, %c0_7] : memref<64x128xbf16, #tpu.memory_space<vmem>>, vector<64x128xbf16>
    %cst_8 = arith.constant dense<0.000000e+00> : vector<32x128xf32>
    %8 = tpu.matmul %6, %7, %cst_8 {dimension_numbers = #tpu.dot_dimension_numbers<[1], [0], [0], [1], [0, 0, 1, 1], [], []>} : vector<32x64xbf16>, vector<64x128xbf16>, vector<32x128xf32> -> vector<32x128xf32>
    %9 = arith.addf %5, %8 : vector<32x128xf32>
    %c0_9 = arith.constant 0 : index
    %c0_10 = arith.constant 0 : index
    %10 = vector.load %arg3[%c0_9, %c0_10] : memref<32x64xbf16, #tpu.memory_space<vmem>>, vector<32x64xbf16>
    %c0_11 = arith.constant 0 : index
    %c0_12 = arith.constant 0 : index
    %11 = vector.load %arg6[%c0_11, %c0_12] : memref<64x128xbf16, #tpu.memory_space<vmem>>, vector<64x128xbf16>
    %cst_13 = arith.constant dense<0.000000e+00> : vector<32x128xf32>
    %12 = tpu.matmul %10, %11, %cst_13 {dimension_numbers = #tpu.dot_dimension_numbers<[1], [0], [0], [1], [0, 0, 1, 1], [], []>} : vector<32x64xbf16>, vector<64x128xbf16>, vector<32x128xf32> -> vector<32x128xf32>
    %13 = arith.addf %9, %12 : vector<32x128xf32>
    %c0_14 = arith.constant 0 : index
    %c0_15 = arith.constant 0 : index
    %14 = vector.load %arg7[%c0_14, %c0_15] : memref<1x128xf32, #tpu.memory_space<vmem>>, vector<1x128xf32>
    %15 = vector.broadcast %14 : vector<1x128xf32> to vector<32x128xf32>
    %16 = arith.addf %13, %15 : vector<32x128xf32>
    %17 = vector.extract_strided_slice %16 {offsets = [0, 0], sizes = [32, 64], strides = [1, 1]} : vector<32x128xf32> to vector<32x64xf32>
    %18 = arith.negf %17 : vector<32x64xf32>
    %19 = math.exp %18 : vector<32x64xf32>
    %cst_16 = arith.constant 1.000000e+00 : f32
    %20 = vector.broadcast %cst_16 : f32 to vector<32x64xf32>
    %21 = arith.addf %20, %19 : vector<32x64xf32>
    %22 = arith.divf %20, %21 : vector<32x64xf32>
    %23 = vector.extract_strided_slice %16 {offsets = [0, 64], sizes = [32, 64], strides = [1, 1]} : vector<32x128xf32> to vector<32x64xf32>
    %cst_17 = arith.constant 0.000000e+00 : f32
    %24 = vector.broadcast %cst_17 : f32 to vector<32x64xf32>
    %25 = arith.maximumf %23, %24 : vector<32x64xf32>
    %26 = math.absf %23 : vector<32x64xf32>
    %cst_18 = arith.constant 0.000000e+00 : f32
    %27 = vector.broadcast %cst_18 : f32 to vector<32x64xf32>
    %28 = arith.subf %27, %26 : vector<32x64xf32>
    %29 = math.exp %28 : vector<32x64xf32>
    %30 = math.log1p %29 : vector<32x64xf32>
    %31 = arith.addf %25, %30 : vector<32x64xf32>
    %32 = arith.mulf %22, %31 : vector<32x64xf32>
    %c0_19 = arith.constant 0 : index
    %c0_20 = arith.constant 0 : index
    %33 = vector.load %arg12[%c0_19, %c0_20] : memref<16x64xf32, #tpu.memory_space<vmem>>, vector<16x64xf32>
    %c0_21 = arith.constant 0 : index
    %c0_22 = arith.constant 0 : index
    %34 = vector.load %arg8[%c0_21, %c0_22] : memref<16x32xbf16, #tpu.memory_space<vmem>>, vector<16x32xbf16>
    %35 = arith.truncf %32 : vector<32x64xf32> to vector<32x64xbf16>
    %cst_23 = arith.constant dense<0.000000e+00> : vector<16x64xf32>
    %36 = tpu.matmul %34, %35, %cst_23 {dimension_numbers = #tpu.dot_dimension_numbers<[1], [0], [0], [1], [0, 0, 1, 1], [], []>} : vector<16x32xbf16>, vector<32x64xbf16>, vector<16x64xf32> -> vector<16x64xf32>
    %37 = arith.addf %33, %36 : vector<16x64xf32>
    %c0_24 = arith.constant 0 : index
    %c0_25 = arith.constant 0 : index
    %38 = vector.load %arg12[%c0_24, %c0_25] : memref<16x64xf32, #tpu.memory_space<vmem>>, vector<16x64xf32>
    tpu.vector_store %arg12[%c0_24, %c0_25], %37 {strides = array<i32>} : memref<16x64xf32, #tpu.memory_space<vmem>>, vector<16x64xf32>,
    %c0_i32_26 = arith.constant 0 : i32
    %39 = arith.cmpi eq, %arg0, %c0_i32_26 : i32
    %40 = arith.extui %39 : i1 to i32
    %c0_i32_27 = arith.constant 0 : i32
    %41 = arith.cmpi ne, %40, %c0_i32_27 : i32
    scf.if %41 {
      %c0_28 = arith.constant 0 : index
      %c0_29 = arith.constant 0 : index
      %42 = vector.load %arg12[%c0_28, %c0_29] : memref<16x64xf32, #tpu.memory_space<vmem>>, vector<16x64xf32>
      %c0_30 = arith.constant 0 : index
      %c0_31 = arith.constant 0 : index
      %43 = vector.load %arg9[%c0_30, %c0_31] : memref<16x64xf32, #tpu.memory_space<vmem>>, vector<16x64xf32>
      %44 = arith.addf %42, %43 : vector<16x64xf32>
      %45 = tpu.iota {dimensions = array<i32: 0>} : vector<16x64xi32>
      %c16_i32 = arith.constant 16 : i32
      %46 = vector.broadcast %c16_i32 : i32 to vector<16x64xi32>
      %47 = arith.cmpi slt, %45, %46 : vector<16x64xi32>
      %cst_32 = arith.constant 0.000000e+00 : f32
      %48 = vector.broadcast %cst_32 : f32 to vector<16x64xf32>
      %49 = arith.select %47, %44, %48 : vector<16x64xi1>, vector<16x64xf32>
      %cst_33 = arith.constant dense<0.000000e+00> : vector<64xf32>
      %50 = vector.multi_reduction <add>, %49, %cst_33 [0] : vector<16x64xf32> to vector<64xf32>
      %51 = vector.shape_cast %50 : vector<64xf32> to vector<1x64xf32>
      %cst_34 = arith.constant 6.250000e-02 : f32
      %52 = vector.broadcast %cst_34 : f32 to vector<1x64xf32>
      %53 = arith.mulf %51, %52 : vector<1x64xf32>
      %54 = vector.broadcast %53 : vector<1x64xf32> to vector<16x64xf32>
      %55 = arith.subf %44, %54 : vector<16x64xf32>
      %56 = arith.mulf %55, %55 : vector<16x64xf32>
      %cst_35 = arith.constant 0.000000e+00 : f32
      %57 = vector.broadcast %cst_35 : f32 to vector<16x64xf32>
      %58 = arith.select %47, %56, %57 : vector<16x64xi1>, vector<16x64xf32>
      %cst_36 = arith.constant dense<0.000000e+00> : vector<64xf32>
      %59 = vector.multi_reduction <add>, %58, %cst_36 [0] : vector<16x64xf32> to vector<64xf32>
      %60 = vector.shape_cast %59 : vector<64xf32> to vector<1x64xf32>
      %cst_37 = arith.constant 6.250000e-02 : f32
      %61 = vector.broadcast %cst_37 : f32 to vector<1x64xf32>
      %62 = arith.mulf %60, %61 : vector<1x64xf32>
      %63 = vector.broadcast %53 : vector<1x64xf32> to vector<16x64xf32>
      %64 = arith.subf %44, %63 : vector<16x64xf32>
      %cst_38 = arith.constant 9.99999974E-6 : f32
      %65 = vector.broadcast %cst_38 : f32 to vector<1x64xf32>
      %66 = arith.addf %62, %65 : vector<1x64xf32>
      %67 = math.rsqrt %66 : vector<1x64xf32>
      %68 = vector.broadcast %67 : vector<1x64xf32> to vector<16x64xf32>
      %69 = arith.mulf %64, %68 : vector<16x64xf32>
      %c0_39 = arith.constant 0 : index
      %c0_40 = arith.constant 0 : index
      %70 = vector.load %arg10[%c0_39, %c0_40] : memref<1x64xf32, #tpu.memory_space<vmem>>, vector<1x64xf32>
      %71 = vector.broadcast %70 : vector<1x64xf32> to vector<16x64xf32>
      %72 = arith.mulf %69, %71 : vector<16x64xf32>
      %c0_41 = arith.constant 0 : index
      %c0_42 = arith.constant 0 : index
      %73 = vector.load %arg11[%c0_41, %c0_42] : memref<1x64xf32, #tpu.memory_space<vmem>>, vector<1x64xf32>
      %74 = vector.broadcast %73 : vector<1x64xf32> to vector<16x64xf32>
      %75 = arith.addf %72, %74 : vector<16x64xf32>
      %cst_43 = arith.constant 0.000000e+00 : f32
      %76 = vector.broadcast %cst_43 : f32 to vector<16x64xf32>
      %77 = arith.maximumf %75, %76 : vector<16x64xf32>
      %c0_44 = arith.constant 0 : index
      %c0_45 = arith.constant 0 : index
      %78 = vector.load %arg12[%c0_44, %c0_45] : memref<16x64xf32, #tpu.memory_space<vmem>>, vector<16x64xf32>
      tpu.vector_store %arg12[%c0_44, %c0_45], %77 {strides = array<i32>} : memref<16x64xf32, #tpu.memory_space<vmem>>, vector<16x64xf32>,
    } else {
    }
    return
  }
  func.func @transform_0(%arg0: i32) -> (i32, i32) {
    %c0_i32 = arith.constant 0 : i32
    %c0_i32_0 = arith.constant 0 : i32
    return %arg0, %c0_i32 : i32, i32
  }
  func.func @transform_1(%arg0: i32) -> (i32, i32) {
    %c0_i32 = arith.constant 0 : i32
    %c0_i32_0 = arith.constant 0 : i32
    return %arg0, %c0_i32 : i32, i32
  }
  func.func @transform_2(%arg0: i32) -> (i32, i32) {
    %c0_i32 = arith.constant 0 : i32
    %c0_i32_0 = arith.constant 0 : i32
    return %arg0, %c0_i32 : i32, i32
  }
  func.func @transform_3(%arg0: i32) -> (i32, i32) {
    %c0_i32 = arith.constant 0 : i32
    %c0_i32_0 = arith.constant 0 : i32
    %c0_i32_1 = arith.constant 0 : i32
    return %c0_i32, %c0_i32_0 : i32, i32
  }
  func.func @transform_4(%arg0: i32) -> (i32, i32) {
    %c0_i32 = arith.constant 0 : i32
    %c0_i32_0 = arith.constant 0 : i32
    %c0_i32_1 = arith.constant 0 : i32
    return %c0_i32, %c0_i32_0 : i32, i32
  }
  func.func @transform_5(%arg0: i32) -> (i32, i32) {
    %c0_i32 = arith.constant 0 : i32
    %c0_i32_0 = arith.constant 0 : i32
    %c0_i32_1 = arith.constant 0 : i32
    return %c0_i32, %c0_i32_0 : i32, i32
  }
  func.func @transform_6(%arg0: i32) -> (i32, i32) {
    %c0_i32 = arith.constant 0 : i32
    %c0_i32_0 = arith.constant 0 : i32
    %c0_i32_1 = arith.constant 0 : i32
    return %c0_i32, %c0_i32_0 : i32, i32
  }
  func.func @transform_7(%arg0: i32) -> (i32, i32) {
    %c0_i32 = arith.constant 0 : i32
    %c0_i32_0 = arith.constant 0 : i32
    return %c0_i32, %arg0 : i32, i32
  }
  func.func @transform_8(%arg0: i32) -> (i32, i32) {
    %c0_i32 = arith.constant 0 : i32
    %c0_i32_0 = arith.constant 0 : i32
    %c0_i32_1 = arith.constant 0 : i32
    return %c0_i32, %c0_i32_0 : i32, i32
  }
  func.func @transform_9(%arg0: i32) -> (i32, i32) {
    %c0_i32 = arith.constant 0 : i32
    %c0_i32_0 = arith.constant 0 : i32
    %c0_i32_1 = arith.constant 0 : i32
    return %c0_i32, %c0_i32_0 : i32, i32
  }
  func.func @transform_10(%arg0: i32) -> (i32, i32) {
    %c0_i32 = arith.constant 0 : i32
    %c0_i32_0 = arith.constant 0 : i32
    %c0_i32_1 = arith.constant 0 : i32
    return %c0_i32, %c0_i32_0 : i32, i32
  }
  func.func @transform_11(%arg0: i32) -> (i32, i32) {
    %c0_i32 = arith.constant 0 : i32
    %c0_i32_0 = arith.constant 0 : i32
    %c0_i32_1 = arith.constant 0 : i32
    return %c0_i32, %c0_i32_0 : i32, i32
  }
}

module attributes {stable_mosaic.version = 11 : i64} {
  func.func @_head_kernel(%arg0: i32, %arg1: memref<2x16xbf16, #tpu.memory_space<vmem>>, %arg2: memref<16x64xf32, #tpu.memory_space<vmem>>, %arg3: memref<2x1xf32, #tpu.memory_space<vmem>>, %arg4: memref<64x64xf32, #tpu.memory_space<vmem>>, %arg5: memref<1x64xf32, #tpu.memory_space<vmem>>, %arg6: memref<64x64xf32, #tpu.memory_space<vmem>>, %arg7: memref<1x64xf32, #tpu.memory_space<vmem>>, %arg8: memref<64x1xf32, #tpu.memory_space<vmem>>, %arg9: memref<1x1xf32, #tpu.memory_space<vmem>>, %arg10: memref<2x1xf32, #tpu.memory_space<vmem>>, %arg11: memref<2x64xf32, #tpu.memory_space<vmem>>) attributes {dimension_semantics = [#tpu.dimension_semantics<arbitrary>], iteration_bounds = array<i64: 1>, scalar_prefetch = 0 : i64, scratch_operands = 1 : i64, tpu.core_type = #tpu.core_type<tc>, window_params = [{transform_indices = @transform_0, window_bounds = array<i64: 2, 16>}, {transform_indices = @transform_1, window_bounds = array<i64: 16, 64>}, {pipeline_mode = #tpu.pipeline_mode<synchronous>, transform_indices = @transform_2, window_bounds = array<i64: 2, 1>}, {pipeline_mode = #tpu.pipeline_mode<synchronous>, transform_indices = @transform_3, window_bounds = array<i64: 64, 64>}, {pipeline_mode = #tpu.pipeline_mode<synchronous>, transform_indices = @transform_4, window_bounds = array<i64: 1, 64>}, {pipeline_mode = #tpu.pipeline_mode<synchronous>, transform_indices = @transform_5, window_bounds = array<i64: 64, 64>}, {pipeline_mode = #tpu.pipeline_mode<synchronous>, transform_indices = @transform_6, window_bounds = array<i64: 1, 64>}, {pipeline_mode = #tpu.pipeline_mode<synchronous>, transform_indices = @transform_7, window_bounds = array<i64: 64, 1>}, {pipeline_mode = #tpu.pipeline_mode<synchronous>, transform_indices = @transform_8, window_bounds = array<i64: 1, 1>}, {pipeline_mode = #tpu.pipeline_mode<synchronous>, transform_indices = @transform_9, window_bounds = array<i64: 2, 1>}]} {
    %c0_i32 = arith.constant 0 : i32
    %0 = arith.cmpi eq, %arg0, %c0_i32 : i32
    %1 = arith.extui %0 : i1 to i32
    %c0_i32_0 = arith.constant 0 : i32
    %2 = arith.cmpi ne, %1, %c0_i32_0 : i32
    scf.if %2 {
      %cst_10 = arith.constant 0.000000e+00 : f32
      %13 = vector.broadcast %cst_10 : f32 to vector<2x64xf32>
      %c0_11 = arith.constant 0 : index
      %c0_12 = arith.constant 0 : index
      %14 = vector.load %arg11[%c0_11, %c0_12] : memref<2x64xf32, #tpu.memory_space<vmem>>, vector<2x64xf32>
      tpu.vector_store %arg11[%c0_11, %c0_12], %13 {strides = array<i32>} : memref<2x64xf32, #tpu.memory_space<vmem>>, vector<2x64xf32>,
    } else {
    }
    %c0 = arith.constant 0 : index
    %c0_1 = arith.constant 0 : index
    %3 = vector.load %arg11[%c0, %c0_1] : memref<2x64xf32, #tpu.memory_space<vmem>>, vector<2x64xf32>
    %c0_2 = arith.constant 0 : index
    %c0_3 = arith.constant 0 : index
    %4 = vector.load %arg1[%c0_2, %c0_3] : memref<2x16xbf16, #tpu.memory_space<vmem>>, vector<2x16xbf16>
    %5 = arith.extf %4 : vector<2x16xbf16> to vector<2x16xf32>
    %c0_4 = arith.constant 0 : index
    %c0_5 = arith.constant 0 : index
    %6 = vector.load %arg2[%c0_4, %c0_5] : memref<16x64xf32, #tpu.memory_space<vmem>>, vector<16x64xf32>
    %cst = arith.constant dense<0.000000e+00> : vector<2x64xf32>
    %7 = tpu.matmul %5, %6, %cst {dimension_numbers = #tpu.dot_dimension_numbers<[1], [0], [0], [1], [0, 0, 1, 1], [], []>} : vector<2x16xf32>, vector<16x64xf32>, vector<2x64xf32> -> vector<2x64xf32>
    %8 = arith.addf %3, %7 : vector<2x64xf32>
    %c0_6 = arith.constant 0 : index
    %c0_7 = arith.constant 0 : index
    %9 = vector.load %arg11[%c0_6, %c0_7] : memref<2x64xf32, #tpu.memory_space<vmem>>, vector<2x64xf32>
    tpu.vector_store %arg11[%c0_6, %c0_7], %8 {strides = array<i32>} : memref<2x64xf32, #tpu.memory_space<vmem>>, vector<2x64xf32>,
    %c0_i32_8 = arith.constant 0 : i32
    %10 = arith.cmpi eq, %arg0, %c0_i32_8 : i32
    %11 = arith.extui %10 : i1 to i32
    %c0_i32_9 = arith.constant 0 : i32
    %12 = arith.cmpi ne, %11, %c0_i32_9 : i32
    scf.if %12 {
      %c0_10 = arith.constant 0 : index
      %c0_11 = arith.constant 0 : index
      %13 = vector.load %arg11[%c0_10, %c0_11] : memref<2x64xf32, #tpu.memory_space<vmem>>, vector<2x64xf32>
      %c0_12 = arith.constant 0 : index
      %c0_13 = arith.constant 0 : index
      %14 = vector.load %arg3[%c0_12, %c0_13] : memref<2x1xf32, #tpu.memory_space<vmem>>, vector<2x1xf32>
      %15 = vector.broadcast %14 : vector<2x1xf32> to vector<2x64xf32>
      %16 = arith.mulf %13, %15 : vector<2x64xf32>
      %c0_14 = arith.constant 0 : index
      %c0_15 = arith.constant 0 : index
      %17 = vector.load %arg4[%c0_14, %c0_15] : memref<64x64xf32, #tpu.memory_space<vmem>>, vector<64x64xf32>
      %cst_16 = arith.constant dense<0.000000e+00> : vector<2x64xf32>
      %18 = tpu.matmul %16, %17, %cst_16 {dimension_numbers = #tpu.dot_dimension_numbers<[1], [0], [0], [1], [0, 0, 1, 1], [], []>} : vector<2x64xf32>, vector<64x64xf32>, vector<2x64xf32> -> vector<2x64xf32>
      %c0_17 = arith.constant 0 : index
      %c0_18 = arith.constant 0 : index
      %19 = vector.load %arg5[%c0_17, %c0_18] : memref<1x64xf32, #tpu.memory_space<vmem>>, vector<1x64xf32>
      %20 = vector.broadcast %19 : vector<1x64xf32> to vector<2x64xf32>
      %21 = arith.addf %18, %20 : vector<2x64xf32>
      %cst_19 = arith.constant 0.000000e+00 : f32
      %22 = vector.broadcast %cst_19 : f32 to vector<2x64xf32>
      %23 = arith.maximumf %21, %22 : vector<2x64xf32>
      %24 = math.absf %21 : vector<2x64xf32>
      %cst_20 = arith.constant 0.000000e+00 : f32
      %25 = vector.broadcast %cst_20 : f32 to vector<2x64xf32>
      %26 = arith.subf %25, %24 : vector<2x64xf32>
      %27 = math.exp %26 : vector<2x64xf32>
      %28 = math.log1p %27 : vector<2x64xf32>
      %29 = arith.addf %23, %28 : vector<2x64xf32>
      %c0_21 = arith.constant 0 : index
      %c0_22 = arith.constant 0 : index
      %30 = vector.load %arg6[%c0_21, %c0_22] : memref<64x64xf32, #tpu.memory_space<vmem>>, vector<64x64xf32>
      %cst_23 = arith.constant dense<0.000000e+00> : vector<2x64xf32>
      %31 = tpu.matmul %29, %30, %cst_23 {dimension_numbers = #tpu.dot_dimension_numbers<[1], [0], [0], [1], [0, 0, 1, 1], [], []>} : vector<2x64xf32>, vector<64x64xf32>, vector<2x64xf32> -> vector<2x64xf32>
      %c0_24 = arith.constant 0 : index
      %c0_25 = arith.constant 0 : index
      %32 = vector.load %arg7[%c0_24, %c0_25] : memref<1x64xf32, #tpu.memory_space<vmem>>, vector<1x64xf32>
      %33 = vector.broadcast %32 : vector<1x64xf32> to vector<2x64xf32>
      %34 = arith.addf %31, %33 : vector<2x64xf32>
      %cst_26 = arith.constant 0.000000e+00 : f32
      %35 = vector.broadcast %cst_26 : f32 to vector<2x64xf32>
      %36 = arith.maximumf %34, %35 : vector<2x64xf32>
      %37 = math.absf %34 : vector<2x64xf32>
      %cst_27 = arith.constant 0.000000e+00 : f32
      %38 = vector.broadcast %cst_27 : f32 to vector<2x64xf32>
      %39 = arith.subf %38, %37 : vector<2x64xf32>
      %40 = math.exp %39 : vector<2x64xf32>
      %41 = math.log1p %40 : vector<2x64xf32>
      %42 = arith.addf %36, %41 : vector<2x64xf32>
      %c0_28 = arith.constant 0 : index
      %c0_29 = arith.constant 0 : index
      %43 = vector.load %arg8[%c0_28, %c0_29] : memref<64x1xf32, #tpu.memory_space<vmem>>, vector<64x1xf32>
      %cst_30 = arith.constant dense<0.000000e+00> : vector<2x1xf32>
      %44 = tpu.matmul %42, %43, %cst_30 {dimension_numbers = #tpu.dot_dimension_numbers<[1], [0], [0], [1], [0, 0, 1, 1], [], []>} : vector<2x64xf32>, vector<64x1xf32>, vector<2x1xf32> -> vector<2x1xf32>
      %c0_31 = arith.constant 0 : index
      %c0_32 = arith.constant 0 : index
      %45 = vector.load %arg9[%c0_31, %c0_32] : memref<1x1xf32, #tpu.memory_space<vmem>>, vector<1x1xf32>
      %46 = vector.broadcast %45 : vector<1x1xf32> to vector<2x1xf32>
      %47 = arith.addf %44, %46 : vector<2x1xf32>
      %c0_33 = arith.constant 0 : index
      %c0_34 = arith.constant 0 : index
      %48 = vector.load %arg10[%c0_33, %c0_34] : memref<2x1xf32, #tpu.memory_space<vmem>>, vector<2x1xf32>
      tpu.vector_store %arg10[%c0_33, %c0_34], %47 {strides = array<i32>} : memref<2x1xf32, #tpu.memory_space<vmem>>, vector<2x1xf32>,
    } else {
    }
    return
  }
  func.func @transform_0(%arg0: i32) -> (i32, i32) {
    %c0_i32 = arith.constant 0 : i32
    %c0_i32_0 = arith.constant 0 : i32
    return %c0_i32, %arg0 : i32, i32
  }
  func.func @transform_1(%arg0: i32) -> (i32, i32) {
    %c0_i32 = arith.constant 0 : i32
    %c0_i32_0 = arith.constant 0 : i32
    return %arg0, %c0_i32 : i32, i32
  }
  func.func @transform_2(%arg0: i32) -> (i32, i32) {
    %c0_i32 = arith.constant 0 : i32
    %c0_i32_0 = arith.constant 0 : i32
    %c0_i32_1 = arith.constant 0 : i32
    return %c0_i32, %c0_i32_0 : i32, i32
  }
  func.func @transform_3(%arg0: i32) -> (i32, i32) {
    %c0_i32 = arith.constant 0 : i32
    %c0_i32_0 = arith.constant 0 : i32
    %c0_i32_1 = arith.constant 0 : i32
    return %c0_i32, %c0_i32_0 : i32, i32
  }
  func.func @transform_4(%arg0: i32) -> (i32, i32) {
    %c0_i32 = arith.constant 0 : i32
    %c0_i32_0 = arith.constant 0 : i32
    %c0_i32_1 = arith.constant 0 : i32
    return %c0_i32, %c0_i32_0 : i32, i32
  }
  func.func @transform_5(%arg0: i32) -> (i32, i32) {
    %c0_i32 = arith.constant 0 : i32
    %c0_i32_0 = arith.constant 0 : i32
    %c0_i32_1 = arith.constant 0 : i32
    return %c0_i32, %c0_i32_0 : i32, i32
  }
  func.func @transform_6(%arg0: i32) -> (i32, i32) {
    %c0_i32 = arith.constant 0 : i32
    %c0_i32_0 = arith.constant 0 : i32
    %c0_i32_1 = arith.constant 0 : i32
    return %c0_i32, %c0_i32_0 : i32, i32
  }
  func.func @transform_7(%arg0: i32) -> (i32, i32) {
    %c0_i32 = arith.constant 0 : i32
    %c0_i32_0 = arith.constant 0 : i32
    %c0_i32_1 = arith.constant 0 : i32
    return %c0_i32, %c0_i32_0 : i32, i32
  }
  func.func @transform_8(%arg0: i32) -> (i32, i32) {
    %c0_i32 = arith.constant 0 : i32
    %c0_i32_0 = arith.constant 0 : i32
    %c0_i32_1 = arith.constant 0 : i32
    return %c0_i32, %c0_i32_0 : i32, i32
  }
  func.func @transform_9(%arg0: i32) -> (i32, i32) {
    %c0_i32 = arith.constant 0 : i32
    %c0_i32_0 = arith.constant 0 : i32
    %c0_i32_1 = arith.constant 0 : i32
    return %c0_i32, %c0_i32_0 : i32, i32
  }
}

</mosaic_0001>

<llo_original>
// kernel: cgcnn_pred_forward.6
$region0: #{cgcnn_pred_forward.6}
  #allocation0 [shape = 'u32[]', space=smem, size = 0x4, offset = 0x4, fixed_abs, tag = 'smem constant byte address 0x4 - core index']
  #allocation1 [shape = 'u32[72,128]{1,0:T(1,128)}', space=vmem, size = 0x9000, scoped, tag = 'internal scratch']
  %s0 = inlined_call_operand.vmem [shape: f32[16,92], index: 0, kind: input, shape index: {}]
  %s1 = inlined_call_operand.vmem [shape: f32[92,64], index: 1, kind: input, shape index: {}]
  %s2 = inlined_call_operand.vmem [shape: f32[1,64], index: 2, kind: input, shape index: {}]
  %s3 = inlined_call_operand.vmem [shape: f32[16,64], index: 3, kind: output, shape index: {}]
  %s4 = sld [smem:[#allocation0]]
  $region22: #{cgcnn_pred_forward.6} parent=0
    _
  %s6 = ssub.s32 1, %s4
  %s7 = scalar_select 0, %s6, %s4
  // Predicated region
  $region2: #{cgcnn_pred_forward.6} parent=0 // pred_check
    _
  $region3: #{cgcnn_pred_forward.6} parent=0 // pred_check_branch
    %9 = sbr.rel (0) target = $region5
  $region4: #{cgcnn_pred_forward.6} parent=0 // pred_region
    _
  $region5: #{cgcnn_pred_forward.6} parent=0 // pred_fallthru
    _
  // Predicated region
  $region6: #{cgcnn_pred_forward.6} parent=0 // pred_check
    _
  $region7: #{cgcnn_pred_forward.6} parent=0 // pred_check_branch
    %11 = sbr.rel (0) target = $region9
  $region8: #{cgcnn_pred_forward.6} parent=0 // pred_region
    _
  $region9: #{cgcnn_pred_forward.6} parent=0 // pred_fallthru
    _
  // Predicated region
  $region10: #{cgcnn_pred_forward.6} parent=0 // pred_check
    _
  $region11: #{cgcnn_pred_forward.6} parent=0 // pred_check_branch
    %13 = sbr.rel (0) target = $region13
  $region12: #{cgcnn_pred_forward.6} parent=0 // pred_region
    _
  $region13: #{cgcnn_pred_forward.6} parent=0 // pred_fallthru
    _
  %v14 = vld [vmem:[%s0] sm:$0xff]
  %v15 = vld [vmem:[%s0 + $0x8] sm:$0xff]
  %v16 = vld [vmem:[%s1] sm:$0xff]
  %v17 = vld [vmem:[%s1 + $0x8] sm:$0xff]
  %v18 = vld [vmem:[%s1 + $0x10] sm:$0xff]
  %v19 = vld [vmem:[%s1 + $0x18] sm:$0xff]
  %v20 = vld [vmem:[%s1 + $0x20] sm:$0xff]
  %v21 = vld [vmem:[%s1 + $0x28] sm:$0xff]
  %v22 = vld [vmem:[%s1 + $0x30] sm:$0xff]
  %v23 = vld [vmem:[%s1 + $0x38] sm:$0xff]
  %v24 = vld [vmem:[%s1 + $0x40] sm:$0xff]
  %v25 = vld [vmem:[%s1 + $0x48] sm:$0xff]
  %v26 = vld [vmem:[%s1 + $0x50] sm:$0xff]
  %v27 = vld [vmem:[%s1 + $0x58] sm:$0xf]
  %v28 = vld [vmem:[%s2] sm:$0x1]
  %v30 = vperm.slane %v28, 0
  %vm32 = vcmask 752640
  %v34 = vsel %vm32, %v14, 0
  %v37 = vsel %vm32, %v15, 0
  %vm39 = vcmask 1043456
  %v41 = vsel %vm39, %v27, 0
  %43 = vmatpush.msra.mxu0 0.0
  %44 = vmatpush.msra.mxu0 0.0
  %45 = vmatpush.msra.mxu0 0.0
  %46 = vmatpush.msra.mxu0 0.0
  %47 = vmatpush.msra.mxu0 %v41
  %48 = vmatpush.msra.mxu0 %v26
  %49 = vmatpush.msra.mxu0 %v25
  %50 = vmatpush.msra.mxu0 %v24
  %51 = vmatpush.msra.mxu0 %v23
  %52 = vmatpush.msra.mxu0 %v22
  %53 = vmatpush.msra.mxu0 %v21
  %54 = vmatpush.msra.mxu0 %v20
  %55 = vmatpush.msra.mxu0 %v19
  %56 = vmatpush.msra.mxu0 %v18
  %57 = vmatpush.msra.mxu0 %v17
  %58 = vmatpush.msra.mxu0 %v16
  %59 = vmatmul.f32.gmra.mxu0 %v34
  %v60 = vpop.f32.mrf.mxu0
  %v61 = vadd.f32 %v30, %v60
  %62 = vmatmul.f32.gmra.mxu0 %v37
  %v63 = vpop.f32.mrf.mxu0
  %v64 = vadd.f32 %v30, %v63
  %65 = vdwg.mxu0
  %vm66 = vcmask 523264
  %67 = vst.msk [vmem:[%s3] sm:$0xff] %vm66, %v61
  %68 = vst.msk [vmem:[%s3 + $0x8] sm:$0xff] %vm66, %v64
  // Predicated region
  $region14: #{cgcnn_pred_forward.6} parent=0 // pred_check
    _
  $region15: #{cgcnn_pred_forward.6} parent=0 // pred_check_branch
    %70 = sbr.rel (0) target = $region17
  $region16: #{cgcnn_pred_forward.6} parent=0 // pred_region
    _
  $region17: #{cgcnn_pred_forward.6} parent=0 // pred_fallthru
    _
  // Predicated region
  $region18: #{cgcnn_pred_forward.6} parent=0 // pred_check
    _
  $region19: #{cgcnn_pred_forward.6} parent=0 // pred_check_branch
    %72 = sbr.rel (0) target = $region21
  $region20: #{cgcnn_pred_forward.6} parent=0 // pred_region
    _
  $region21: #{cgcnn_pred_forward.6} parent=0 // pred_fallthru
    _

// kernel: cgcnn_pred_forward.7
$region0: #{cgcnn_pred_forward.7}
  #allocation0 [shape = 'u32[]', space=smem, size = 0x4, offset = 0x4, fixed_abs, tag = 'smem constant byte address 0x4 - core index']
  #allocation1 [shape = 'u32[72,128]{1,0:T(1,128)}', space=vmem, size = 0x9000, scoped, tag = 'internal scratch']
  %s0 = inlined_call_operand.vmem [shape: f32[32,41], index: 0, kind: input, shape index: {}]
  %s1 = inlined_call_operand.vmem [shape: f32[41,64], index: 1, kind: input, shape index: {}]
  %s2 = inlined_call_operand.vmem [shape: f32[1,64], index: 2, kind: input, shape index: {}]
  %s3 = inlined_call_operand.vmem [shape: f32[32,64], index: 3, kind: output, shape index: {}]
  %s4 = sld [smem:[#allocation0]]
  $region22: #{cgcnn_pred_forward.7} parent=0
    _
  %s6 = ssub.s32 1, %s4
  %s7 = scalar_select 0, %s6, %s4
  // Predicated region
  $region2: #{cgcnn_pred_forward.7} parent=0 // pred_check
    _
  $region3: #{cgcnn_pred_forward.7} parent=0 // pred_check_branch
    %9 = sbr.rel (0) target = $region5
  $region4: #{cgcnn_pred_forward.7} parent=0 // pred_region
    _
  $region5: #{cgcnn_pred_forward.7} parent=0 // pred_fallthru
    _
  // Predicated region
  $region6: #{cgcnn_pred_forward.7} parent=0 // pred_check
    _
  $region7: #{cgcnn_pred_forward.7} parent=0 // pred_check_branch
    %11 = sbr.rel (0) target = $region9
  $region8: #{cgcnn_pred_forward.7} parent=0 // pred_region
    _
  $region9: #{cgcnn_pred_forward.7} parent=0 // pred_fallthru
    _
  // Predicated region
  $region10: #{cgcnn_pred_forward.7} parent=0 // pred_check
    _
  $region11: #{cgcnn_pred_forward.7} parent=0 // pred_check_branch
    %13 = sbr.rel (0) target = $region13
  $region12: #{cgcnn_pred_forward.7} parent=0 // pred_region
    _
  $region13: #{cgcnn_pred_forward.7} parent=0 // pred_fallthru
    _
  %v14 = vld [vmem:[%s0] sm:$0xff]
  %v15 = vld [vmem:[%s0 + $0x8] sm:$0xff]
  %v16 = vld [vmem:[%s0 + $0x10] sm:$0xff]
  %v17 = vld [vmem:[%s0 + $0x18] sm:$0xff]
  %v18 = vld [vmem:[%s1] sm:$0xff]
  %v19 = vld [vmem:[%s1 + $0x8] sm:$0xff]
  %v20 = vld [vmem:[%s1 + $0x10] sm:$0xff]
  %v21 = vld [vmem:[%s1 + $0x18] sm:$0xff]
  %v22 = vld [vmem:[%s1 + $0x20] sm:$0xff]
  %v23 = vld [vmem:[%s1 + $0x28] sm:$0x1]
  %v24 = vld [vmem:[%s2] sm:$0x1]
  %v26 = vperm.slane %v24, 0
  %vm28 = vcmask 334848
  %v30 = vsel %vm28, %v14, 0
  %v33 = vsel %vm28, %v15, 0
  %v36 = vsel %vm28, %v16, 0
  %v39 = vsel %vm28, %v17, 0
  %vm41 = vcmask 1040384
  %v43 = vsel %vm41, %v23, 0
  %45 = vmatpush.msra.mxu0 0.0
  %46 = vmatpush.msra.mxu0 0.0
  %47 = vmatpush.msra.mxu0 0.0
  %48 = vmatpush.msra.mxu0 0.0
  %49 = vmatpush.msra.mxu0 0.0
  %50 = vmatpush.msra.mxu0 0.0
  %51 = vmatpush.msra.mxu0 0.0
  %52 = vmatpush.msra.mxu0 0.0
  %53 = vmatpush.msra.mxu0 0.0
  %54 = vmatpush.msra.mxu0 0.0
  %55 = vmatpush.msra.mxu0 %v43
  %56 = vmatpush.msra.mxu0 %v22
  %57 = vmatpush.msra.mxu0 %v21
  %58 = vmatpush.msra.mxu0 %v20
  %59 = vmatpush.msra.mxu0 %v19
  %60 = vmatpush.msra.mxu0 %v18
  %61 = vmatmul.f32.gmra.mxu0 %v30
  %v62 = vpop.f32.mrf.mxu0
  %v63 = vadd.f32 %v26, %v62
  %64 = vmatmul.f32.gmra.mxu0 %v33
  %v65 = vpop.f32.mrf.mxu0
  %v66 = vadd.f32 %v26, %v65
  %67 = vmatmul.f32.gmra.mxu0 %v36
  %v68 = vpop.f32.mrf.mxu0
  %v69 = vadd.f32 %v26, %v68
  %70 = vmatmul.f32.gmra.mxu0 %v39
  %v71 = vpop.f32.mrf.mxu0
  %v72 = vadd.f32 %v26, %v71
  %73 = vdwg.mxu0
  %vm74 = vcmask 523264
  %75 = vst.msk [vmem:[%s3] sm:$0xff] %vm74, %v63
  %76 = vst.msk [vmem:[%s3 + $0x8] sm:$0xff] %vm74, %v66
  %77 = vst.msk [vmem:[%s3 + $0x10] sm:$0xff] %vm74, %v69
  %78 = vst.msk [vmem:[%s3 + $0x18] sm:$0xff] %vm74, %v72
  // Predicated region
  $region14: #{cgcnn_pred_forward.7} parent=0 // pred_check
    _
  $region15: #{cgcnn_pred_forward.7} parent=0 // pred_check_branch
    %80 = sbr.rel (0) target = $region17
  $region16: #{cgcnn_pred_forward.7} parent=0 // pred_region
    _
  $region17: #{cgcnn_pred_forward.7} parent=0 // pred_fallthru
    _
  // Predicated region
  $region18: #{cgcnn_pred_forward.7} parent=0 // pred_check
    _
  $region19: #{cgcnn_pred_forward.7} parent=0 // pred_check_branch
    %82 = sbr.rel (0) target = $region21
  $region20: #{cgcnn_pred_forward.7} parent=0 // pred_region
    _
  $region21: #{cgcnn_pred_forward.7} parent=0 // pred_fallthru
    _

// kernel: cgcnn_pred_forward.10
$region0: #{cgcnn_pred_forward.10}
  #allocation0 [shape = 'u32[]', space=smem, size = 0x4, offset = 0x4, fixed_abs, tag = 'smem constant byte address 0x4 - core index']
  #allocation1 [shape = 'u32[72,128]{1,0:T(1,128)}', space=vmem, size = 0x9000, scoped, tag = 'internal scratch']
  %s0 = inlined_call_operand.vmem [shape: bf16[32,64], index: 0, kind: input, shape index: {}]
  %s1 = inlined_call_operand.vmem [shape: bf16[32,64], index: 1, kind: input, shape index: {}]
  %s2 = inlined_call_operand.vmem [shape: bf16[32,64], index: 2, kind: input, shape index: {}]
  %s3 = inlined_call_operand.vmem [shape: bf16[64,128], index: 3, kind: input, shape index: {}]
  %s4 = inlined_call_operand.vmem [shape: bf16[64,128], index: 4, kind: input, shape index: {}]
  %s5 = inlined_call_operand.vmem [shape: bf16[64,128], index: 5, kind: input, shape index: {}]
  %s6 = inlined_call_operand.vmem [shape: f32[1,128], index: 6, kind: input, shape index: {}]
  %s7 = inlined_call_operand.vmem [shape: bf16[16,32], index: 7, kind: input, shape index: {}]
  %s8 = inlined_call_operand.vmem [shape: f32[16,64], index: 8, kind: input, shape index: {}]
  %s9 = inlined_call_operand.vmem [shape: f32[1,64], index: 9, kind: input, shape index: {}]
  %s10 = inlined_call_operand.vmem [shape: f32[1,64], index: 10, kind: input, shape index: {}]
  %s11 = inlined_call_operand.vmem [shape: f32[16,64], index: 11, kind: output, shape index: {}]
  %s12 = sld [smem:[#allocation0]]
  $region62: #{cgcnn_pred_forward.10} parent=0
    _
  %s14 = ssub.s32 1, %s12
  %s15 = scalar_select 0, %s14, %s12
  // Predicated region
  $region2: #{cgcnn_pred_forward.10} parent=0 // pred_check
    _
  $region3: #{cgcnn_pred_forward.10} parent=0 // pred_check_branch
    %17 = sbr.rel (0) target = $region5
  $region4: #{cgcnn_pred_forward.10} parent=0 // pred_region
    _
  $region5: #{cgcnn_pred_forward.10} parent=0 // pred_fallthru
    _
  // Predicated region
  $region6: #{cgcnn_pred_forward.10} parent=0 // pred_check
    _
  $region7: #{cgcnn_pred_forward.10} parent=0 // pred_check_branch
    %19 = sbr.rel (0) target = $region9
  $region8: #{cgcnn_pred_forward.10} parent=0 // pred_region
    _
  $region9: #{cgcnn_pred_forward.10} parent=0 // pred_fallthru
    _
  // Predicated region
  $region10: #{cgcnn_pred_forward.10} parent=0 // pred_check
    _
  $region11: #{cgcnn_pred_forward.10} parent=0 // pred_check_branch
    %21 = sbr.rel (0) target = $region13
  $region12: #{cgcnn_pred_forward.10} parent=0 // pred_region
    _
  $region13: #{cgcnn_pred_forward.10} parent=0 // pred_fallthru
    _
  // Predicated region
  $region14: #{cgcnn_pred_forward.10} parent=0 // pred_check
    _
  $region15: #{cgcnn_pred_forward.10} parent=0 // pred_check_branch
    %23 = sbr.rel (0) target = $region17
  $region16: #{cgcnn_pred_forward.10} parent=0 // pred_region
    _
  $region17: #{cgcnn_pred_forward.10} parent=0 // pred_fallthru
    _
  // Predicated region
  $region18: #{cgcnn_pred_forward.10} parent=0 // pred_check
    _
  $region19: #{cgcnn_pred_forward.10} parent=0 // pred_check_branch
    %25 = sbr.rel (0) target = $region21
  $region20: #{cgcnn_pred_forward.10} parent=0 // pred_region
    _
  $region21: #{cgcnn_pred_forward.10} parent=0 // pred_fallthru
    _
  // Predicated region
  $region22: #{cgcnn_pred_forward.10} parent=0 // pred_check
    _
  $region23: #{cgcnn_pred_forward.10} parent=0 // pred_check_branch
    %27 = sbr.rel (0) target = $region25
  $region24: #{cgcnn_pred_forward.10} parent=0 // pred_region
    _
  $region25: #{cgcnn_pred_forward.10} parent=0 // pred_fallthru
    _
  // Predicated region
  $region26: #{cgcnn_pred_forward.10} parent=0 // pred_check
    _
  $region27: #{cgcnn_pred_forward.10} parent=0 // pred_check_branch
    %29 = sbr.rel (0) target = $region29
  $region28: #{cgcnn_pred_forward.10} parent=0 // pred_region
    _
  $region29: #{cgcnn_pred_forward.10} parent=0 // pred_fallthru
    _
  // Predicated region
  $region30: #{cgcnn_pred_forward.10} parent=0 // pred_check
    _
  $region31: #{cgcnn_pred_forward.10} parent=0 // pred_check_branch
    %31 = sbr.rel (0) target = $region33
  $region32: #{cgcnn_pred_forward.10} parent=0 // pred_region
    _
  $region33: #{cgcnn_pred_forward.10} parent=0 // pred_fallthru
    _
  // Predicated region
  $region34: #{cgcnn_pred_forward.10} parent=0 // pred_check
    _
  $region35: #{cgcnn_pred_forward.10} parent=0 // pred_check_branch
    %33 = sbr.rel (0) target = $region37
  $region36: #{cgcnn_pred_forward.10} parent=0 // pred_region
    _
  $region37: #{cgcnn_pred_forward.10} parent=0 // pred_fallthru
    _
  // Predicated region
  $region38: #{cgcnn_pred_forward.10} parent=0 // pred_check
    _
  $region39: #{cgcnn_pred_forward.10} parent=0 // pred_check_branch
    %35 = sbr.rel (0) target = $region41
  $region40: #{cgcnn_pred_forward.10} parent=0 // pred_region
    _
  $region41: #{cgcnn_pred_forward.10} parent=0 // pred_fallthru
    _
  // Predicated region
  $region42: #{cgcnn_pred_forward.10} parent=0 // pred_check
    _
  $region43: #{cgcnn_pred_forward.10} parent=0 // pred_check_branch
    %37 = sbr.rel (0) target = $region45
  $region44: #{cgcnn_pred_forward.10} parent=0 // pred_region
    _
  $region45: #{cgcnn_pred_forward.10} parent=0 // pred_fallthru
    _
  %p39 = scmp.eq.s32.totalorder 0, 0
  // Predicated region
  $region46: #{cgcnn_pred_forward.10} parent=0 // pred_check
    %p40 = pneg %p39
  $region47: #{cgcnn_pred_forward.10} parent=0 // pred_check_branch
    %42 = sbr.rel (%p40) target = $region49
  $region48: #{cgcnn_pred_forward.10} parent=0 // pred_region
    %vm43 = vcmask 523264
    %44 = vst.msk [vmem:[%s11] sm:$0xff] %vm43, 0.0
    %45 = vst.msk [vmem:[%s11 + $0x8] sm:$0xff] %vm43, 0.0
  $region49: #{cgcnn_pred_forward.10} parent=0 // pred_fallthru
    _
  %v46 = vld [vmem:[%s0] sm:$0xf]
  %v47 = vld [vmem:[%s0 + $0x4] sm:$0xf]
  %v48 = vld [vmem:[%s0 + $0x8] sm:$0xf]
  %v49 = vld [vmem:[%s0 + $0xc] sm:$0xf]
  %v50 = vld [vmem:[%s3] sm:$0xf]
  %v51 = vld [vmem:[%s3 + $0x4] sm:$0xf]
  %v52 = vld [vmem:[%s3 + $0x8] sm:$0xf]
  %v53 = vld [vmem:[%s3 + $0xc] sm:$0xf]
  %v54 = vld [vmem:[%s3 + $0x10] sm:$0xf]
  %v55 = vld [vmem:[%s3 + $0x14] sm:$0xf]
  %v56 = vld [vmem:[%s3 + $0x18] sm:$0xf]
  %v57 = vld [vmem:[%s3 + $0x1c] sm:$0xf]
  %v58 = vld [vmem:[%s1] sm:$0xf]
  %v59 = vld [vmem:[%s1 + $0x4] sm:$0xf]
  %v60 = vld [vmem:[%s1 + $0x8] sm:$0xf]
  %v61 = vld [vmem:[%s1 + $0xc] sm:$0xf]
  %v62 = vld [vmem:[%s4] sm:$0xf]
  %v63 = vld [vmem:[%s4 + $0x4] sm:$0xf]
  %v64 = vld [vmem:[%s4 + $0x8] sm:$0xf]
  %v65 = vld [vmem:[%s4 + $0xc] sm:$0xf]
  %v66 = vld [vmem:[%s4 + $0x10] sm:$0xf]
  %v67 = vld [vmem:[%s4 + $0x14] sm:$0xf]
  %v68 = vld [vmem:[%s4 + $0x18] sm:$0xf]
  %v69 = vld [vmem:[%s4 + $0x1c] sm:$0xf]
  %v74 = vunpack.c.l.b16 %v58
  %v75 = vunpack.c.l.b16 %v59
  %v76 = vunpack.c.l.b16 %v60
  %v77 = vunpack.c.l.b16 %v61
  %v78 = vpack.c.b16 %v75, %v74
  %v79 = vpack.c.b16 %v77, %v76
  %v88 = vunpack.c.l.b16 %v62
  %v89 = vunpack.c.l.b16 %v63
  %v90 = vunpack.c.l.b16 %v64
  %v91 = vunpack.c.l.b16 %v65
  %v92 = vunpack.c.l.b16 %v66
  %v93 = vunpack.c.l.b16 %v67
  %v94 = vunpack.c.l.b16 %v68
  %v95 = vunpack.c.l.b16 %v69
  %v96 = vpack.c.b16 %v89, %v88
  %v97 = vpack.c.b16 %v91, %v90
  %v98 = vpack.c.b16 %v93, %v92
  %v99 = vpack.c.b16 %v95, %v94
  %vm104 = vcmask 523264
  %v106 = vsel %vm104, %v78, 0
  %v109 = vsel %vm104, %v79, 0
  %111 = vmatpush.bf16.msra.mxu0 0
  %112 = vmatpush.bf16.msra.mxu0 0
  %113 = vmatpush.bf16.msra.mxu0 0
  %114 = vmatpush.bf16.msra.mxu0 0
  %115 = vmatpush.bf16.msra.mxu0 %v99
  %116 = vmatpush.bf16.msra.mxu0 %v98
  %117 = vmatpush.bf16.msra.mxu0 %v97
  %118 = vmatpush.bf16.msra.mxu0 %v96
  %119 = vmatmul.bf16.gmra.mxu0 %v106
  %v120 = vpop.f32.mrf.mxu0
  %v121 = vadd.f32 0.0, %v120
  %v122 = vpop.f32.mrf.mxu0
  %v123 = vadd.f32 0.0, %v122
  %124 = vmatmul.bf16.gmra.mxu0 %v109
  %v125 = vpop.f32.mrf.mxu0
  %v126 = vadd.f32 0.0, %v125
  %v127 = vpop.f32.mrf.mxu0
  %v128 = vadd.f32 0.0, %v127
  %129 = vdwg.mxu0
  %v134 = vunpack.c.l.b16 %v46
  %v135 = vunpack.c.l.b16 %v47
  %v136 = vunpack.c.l.b16 %v48
  %v137 = vunpack.c.l.b16 %v49
  %v138 = vpack.c.b16 %v135, %v134
  %v139 = vpack.c.b16 %v137, %v136
  %v148 = vunpack.c.l.b16 %v50
  %v149 = vunpack.c.l.b16 %v51
  %v150 = vunpack.c.l.b16 %v52
  %v151 = vunpack.c.l.b16 %v53
  %v152 = vunpack.c.l.b16 %v54
  %v153 = vunpack.c.l.b16 %v55
  %v154 = vunpack.c.l.b16 %v56
  %v155 = vunpack.c.l.b16 %v57
  %v156 = vpack.c.b16 %v149, %v148
  %v157 = vpack.c.b16 %v151, %v150
  %v158 = vpack.c.b16 %v153, %v152
  %v159 = vpack.c.b16 %v155, %v154
  %v165 = vsel %vm104, %v138, 0
  %v168 = vsel %vm104, %v139, 0
  %170 = vmatpush.bf16.msra.mxu0 0
  %171 = vmatpush.bf16.msra.mxu0 0
  %172 = vmatpush.bf16.msra.mxu0 0
  %173 = vmatpush.bf16.msra.mxu0 0
  %174 = vmatpush.bf16.msra.mxu0 %v159
  %175 = vmatpush.bf16.msra.mxu0 %v158
  %176 = vmatpush.bf16.msra.mxu0 %v157
  %177 = vmatpush.bf16.msra.mxu0 %v156
  %178 = vmatmul.bf16.gmra.mxu0 %v165
  %v179 = vpop.f32.mrf.mxu0
  %v180 = vadd.f32 %v121, %v179
  %v181 = vpop.f32.mrf.mxu0
  %v182 = vadd.f32 %v123, %v181
  %183 = vmatmul.bf16.gmra.mxu0 %v168
  %v184 = vpop.f32.mrf.mxu0
  %v185 = vadd.f32 %v126, %v184
  %v186 = vpop.f32.mrf.mxu0
  %v187 = vadd.f32 %v128, %v186
  %188 = vdwg.mxu0
  %v189 = vld [vmem:[%s2] sm:$0xf]
  %v190 = vld [vmem:[%s2 + $0x4] sm:$0xf]
  %v191 = vld [vmem:[%s2 + $0x8] sm:$0xf]
  %v192 = vld [vmem:[%s2 + $0xc] sm:$0xf]
  %v193 = vld [vmem:[%s5] sm:$0xf]
  %v194 = vld [vmem:[%s5 + $0x4] sm:$0xf]
  %v195 = vld [vmem:[%s5 + $0x8] sm:$0xf]
  %v196 = vld [vmem:[%s5 + $0xc] sm:$0xf]
  %v197 = vld [vmem:[%s5 + $0x10] sm:$0xf]
  %v198 = vld [vmem:[%s5 + $0x14] sm:$0xf]
  %v199 = vld [vmem:[%s5 + $0x18] sm:$0xf]
  %v200 = vld [vmem:[%s5 + $0x1c] sm:$0xf]
  %v205 = vunpack.c.l.b16 %v189
  %v206 = vunpack.c.l.b16 %v190
  %v207 = vunpack.c.l.b16 %v191
  %v208 = vunpack.c.l.b16 %v192
  %v209 = vpack.c.b16 %v206, %v205
  %v210 = vpack.c.b16 %v208, %v207
  %v219 = vunpack.c.l.b16 %v193
  %v220 = vunpack.c.l.b16 %v194
  %v221 = vunpack.c.l.b16 %v195
  %v222 = vunpack.c.l.b16 %v196
  %v223 = vunpack.c.l.b16 %v197
  %v224 = vunpack.c.l.b16 %v198
  %v225 = vunpack.c.l.b16 %v199
  %v226 = vunpack.c.l.b16 %v200
  %v227 = vpack.c.b16 %v220, %v219
  %v228 = vpack.c.b16 %v222, %v221
  %v229 = vpack.c.b16 %v224, %v223
  %v230 = vpack.c.b16 %v226, %v225
  %v236 = vsel %vm104, %v209, 0
  %v239 = vsel %vm104, %v210, 0
  %241 = vmatpush.bf16.msra.mxu0 0
  %242 = vmatpush.bf16.msra.mxu0 0
  %243 = vmatpush.bf16.msra.mxu0 0
  %244 = vmatpush.bf16.msra.mxu0 0
  %245 = vmatpush.bf16.msra.mxu0 %v230
  %246 = vmatpush.bf16.msra.mxu0 %v229
  %247 = vmatpush.bf16.msra.mxu0 %v228
  %248 = vmatpush.bf16.msra.mxu0 %v227
  %249 = vmatmul.bf16.gmra.mxu0 %v236
  %v250 = vpop.f32.mrf.mxu0
  %v251 = vadd.f32 0.0, %v250
  %v252 = vpop.f32.mrf.mxu0
  %v253 = vadd.f32 0.0, %v252
  %254 = vmatmul.bf16.gmra.mxu0 %v239
  %v255 = vpop.f32.mrf.mxu0
  %v256 = vadd.f32 0.0, %v255
  %v257 = vpop.f32.mrf.mxu0
  %v258 = vadd.f32 0.0, %v257
  %259 = vdwg.mxu0
  %v260 = vadd.f32 %v180, %v251
  %v261 = vadd.f32 %v182, %v253
  %v262 = vadd.f32 %v185, %v256
  %v263 = vadd.f32 %v187, %v258
  %v264 = vld [vmem:[%s6] sm:$0x1]
  %v266 = vperm.slane %v264, 0
  %v268 = vadd.f32 %v260, %v266
  %v269 = vadd.f32 %v261, %v266
  %v270 = vadd.f32 %v262, %v266
  %v271 = vadd.f32 %v263, %v266
  %v272 = vxor.u32 %v268, 2147483648
  %v273 = vxor.u32 %v269, 2147483648
  %v274 = vxor.u32 %v270, 2147483648
  %v275 = vxor.u32 %v271, 2147483648
  %v276 = vmul.f32 %v272, 1.442695
  %v277 = vpow.pop %v276
  %v278 = vmul.f32 %v273, 1.442695
  %v279 = vpow.pop %v278
  %v280 = vmul.f32 %v274, 1.442695
  %v281 = vpow.pop %v280
  %v282 = vmul.f32 %v275, 1.442695
  %v283 = vpow.pop %v282
  %v284 = vadd.f32 %v277, 1.0
  %v285 = vadd.f32 %v279, 1.0
  %v286 = vadd.f32 %v281, 1.0
  %v287 = vadd.f32 %v283, 1.0
  %v288 = vrcp.pop %v284
  %v289 = vmul.f32 %v284, %v288
  %v290 = vsub.f32 1.0, %v289
  %v291 = vmul.f32 %v288, %v290
  %v292 = vadd.f32 %v288, %v291
  %vm293 = vweird.f32 %v284
  %vm294 = vweird.f32 %v288
  %vm295 = vmor %vm293, %vm294
  %v296 = vsel %vm295, %v288, %v292
  %v297 = vand.u32 2147483647, %v284
  %vm298 = vcmp.eq.f32.partialorder %v297, 8.507059e+37
  %v299 = vand.u32 %v284, 2147483648
  %v300 = vor.u32 1.1754944e-38, %v299
  %v301 = vsel %vm298, %v300, %v296
  %v302 = vmul.f32 1.0, %v301
  %v303 = vrcp.pop %v285
  %v304 = vmul.f32 %v285, %v303
  %v305 = vsub.f32 1.0, %v304
  %v306 = vmul.f32 %v303, %v305
  %v307 = vadd.f32 %v303, %v306
  %vm308 = vweird.f32 %v285
  %vm309 = vweird.f32 %v303
  %vm310 = vmor %vm308, %vm309
  %v311 = vsel %vm310, %v303, %v307
  %v312 = vand.u32 2147483647, %v285
  %vm313 = vcmp.eq.f32.partialorder %v312, 8.507059e+37
  %v314 = vand.u32 %v285, 2147483648
  %v315 = vor.u32 1.1754944e-38, %v314
  %v316 = vsel %vm313, %v315, %v311
  %v317 = vmul.f32 1.0, %v316
  %v318 = vrcp.pop %v286
  %v319 = vmul.f32 %v286, %v318
  %v320 = vsub.f32 1.0, %v319
  %v321 = vmul.f32 %v318, %v320
  %v322 = vadd.f32 %v318, %v321
  %vm323 = vweird.f32 %v286
  %vm324 = vweird.f32 %v318
  %vm325 = vmor %vm323, %vm324
  %v326 = vsel %vm325, %v318, %v322
  %v327 = vand.u32 2147483647, %v286
  %vm328 = vcmp.eq.f32.partialorder %v327, 8.507059e+37
  %v329 = vand.u32 %v286, 2147483648
  %v330 = vor.u32 1.1754944e-38, %v329
  %v331 = vsel %vm328, %v330, %v326
  %v332 = vmul.f32 1.0, %v331
  %v333 = vrcp.pop %v287
  %v334 = vmul.f32 %v287, %v333
  %v335 = vsub.f32 1.0, %v334
  %v336 = vmul.f32 %v333, %v335
  %v337 = vadd.f32 %v333, %v336
  %vm338 = vweird.f32 %v287
  %vm339 = vweird.f32 %v333
  %vm340 = vmor %vm338, %vm339
  %v341 = vsel %vm340, %v333, %v337
  %v342 = vand.u32 2147483647, %v287
  %vm343 = vcmp.eq.f32.partialorder %v342, 8.507059e+37
  %v344 = vand.u32 %v287, 2147483648
  %v345 = vor.u32 1.1754944e-38, %v344
  %v346 = vsel %vm343, %v345, %v341
  %v347 = vmul.f32 1.0, %v346
  %v348 = vmax.f32 %v268, 0.0
  %v349 = vmax.f32 %v269, 0.0
  %v350 = vmax.f32 %v270, 0.0
  %v351 = vmax.f32 %v271, 0.0
  %v352 = vand.u32 2147483647, %v268
  %v353 = vand.u32 2147483647, %v269
  %v354 = vand.u32 2147483647, %v270
  %v355 = vand.u32 2147483647, %v271
  %v356 = vsub.f32 0.0, %v352
  %v357 = vsub.f32 0.0, %v353
  %v358 = vsub.f32 0.0, %v354
  %v359 = vsub.f32 0.0, %v355
  %v360 = vmul.f32 %v356, 1.442695
  %v361 = vpow.pop %v360
  %v362 = vmul.f32 %v357, 1.442695
  %v363 = vpow.pop %v362
  %v364 = vmul.f32 %v358, 1.442695
  %v365 = vpow.pop %v364
  %v366 = vmul.f32 %v359, 1.442695
  %v367 = vpow.pop %v366
  %v368 = vadd.f32 %v361, 1.0
  %v369 = vlog2.pop %v368
  %v370 = vmul.f32 %v369, 0.6931472
  %v371 = vmul.f32 -0.5, %v361
  %v372 = vadd.f32 %v371, 1.0
  %v373 = vmul.f32 %v372, %v361
  %v374 = vand.u32 2147483647, %v361
  %vm375 = vcmp.lt.f32.partialorder %v374, 0.0004427343
  %v376 = vsel %vm375, %v373, %v370
  %v377 = vadd.f32 %v363, 1.0
  %v378 = vlog2.pop %v377
  %v379 = vmul.f32 %v378, 0.6931472
  %v380 = vmul.f32 -0.5, %v363
  %v381 = vadd.f32 %v380, 1.0
  %v382 = vmul.f32 %v381, %v363
  %v383 = vand.u32 2147483647, %v363
  %vm384 = vcmp.lt.f32.partialorder %v383, 0.0004427343
  %v385 = vsel %vm384, %v382, %v379
  %v386 = vadd.f32 %v365, 1.0
  %v387 = vlog2.pop %v386
  %v388 = vmul.f32 %v387, 0.6931472
  %v389 = vmul.f32 -0.5, %v365
  %v390 = vadd.f32 %v389, 1.0
  %v391 = vmul.f32 %v390, %v365
  %v392 = vand.u32 2147483647, %v365
  %vm393 = vcmp.lt.f32.partialorder %v392, 0.0004427343
  %v394 = vsel %vm393, %v391, %v388
  %v395 = vadd.f32 %v367, 1.0
  %v396 = vlog2.pop %v395
  %v397 = vmul.f32 %v396, 0.6931472
  %v398 = vmul.f32 -0.5, %v367
  %v399 = vadd.f32 %v398, 1.0
  %v400 = vmul.f32 %v399, %v367
  %v401 = vand.u32 2147483647, %v367
  %vm402 = vcmp.lt.f32.partialorder %v401, 0.0004427343
  %v403 = vsel %vm402, %v400, %v397
  %v404 = vadd.f32 %v348, %v376
  %v405 = vadd.f32 %v349, %v385
  %v406 = vadd.f32 %v350, %v394
  %v407 = vadd.f32 %v351, %v403
  %412 = vrot.lane.b32.xlu0 %v404, 64
  %v413 = vpop.permute.xlu0 %412
  %414 = vrot.lane.b32.xlu0 %v405, 64
  %v415 = vpop.permute.xlu0 %414
  %416 = vrot.lane.b32.xlu0 %v406, 64
  %v417 = vpop.permute.xlu0 %416
  %418 = vrot.lane.b32.xlu0 %v407, 64
  %v419 = vpop.permute.xlu0 %418
  %v424 = vmul.f32 %v302, %v413
  %v425 = vmul.f32 %v317, %v415
  %v426 = vmul.f32 %v332, %v417
  %v427 = vmul.f32 %v347, %v419
  %v428 = vld [vmem:[%s11] sm:$0xff]
  %v429 = vld [vmem:[%s11 + $0x8] sm:$0xff]
  %v430 = vld [vmem:[%s7] sm:$0xf]
  %v431 = vld [vmem:[%s7 + $0x4] sm:$0xf]
  %v432 = vpack.c.bf16 %v425, %v424
  %v433 = vpack.c.bf16 %v427, %v426
  %v436 = vunpack.c.l.b16 %v430
  %v437 = vunpack.c.l.b16 %v431
  %v438 = vpack.c.b16 %v437, %v436
  %vm439 = vcmask 261120
  %v441 = vsel %vm439, %v438, 0
  %443 = vmatpush.bf16.msra.mxu0 0
  %444 = vmatpush.bf16.msra.mxu0 0
  %445 = vmatpush.bf16.msra.mxu0 0
  %446 = vmatpush.bf16.msra.mxu0 0
  %447 = vmatpush.bf16.msra.mxu0 0
  %448 = vmatpush.bf16.msra.mxu0 0
  %449 = vmatpush.bf16.msra.mxu0 %v433
  %450 = vmatpush.bf16.msra.mxu0 %v432
  %451 = vmatmul.bf16.gmra.mxu0 %v441
  %v452 = vpop.f32.mrf.mxu0
  %v453 = vadd.f32 0.0, %v452
  %v454 = vpop.f32.mrf.mxu0
  %v455 = vadd.f32 0.0, %v454
  %456 = vdwg.mxu0
  %v457 = vadd.f32 %v428, %v453
  %v458 = vadd.f32 %v429, %v455
  %459 = vst.msk [vmem:[%s11] sm:$0xff] %vm104, %v457
  %460 = vst.msk [vmem:[%s11 + $0x8] sm:$0xff] %vm104, %v458
  // Predicated region
  $region50: #{cgcnn_pred_forward.10} parent=0 // pred_check
    %p461 = pneg %p39
  $region51: #{cgcnn_pred_forward.10} parent=0 // pred_check_branch
    %463 = sbr.rel (%p461) target = $region53
  $region52: #{cgcnn_pred_forward.10} parent=0 // pred_region
    %v464 = vld [vmem:[%s11] sm:$0xff]
    %v465 = vld [vmem:[%s11 + $0x8] sm:$0xff]
    %v466 = vld [vmem:[%s8] sm:$0xff]
    %v467 = vld [vmem:[%s8 + $0x8] sm:$0xff]
    %v468 = vadd.f32 %v464, %v466
    %v469 = vadd.f32 %v465, %v467
    %v470 = vlaneseq
    %v471 = vshrl.u32 %v470, 7
    %v472 = vadd.s32 %v471, 8
    %vm473 = vcmp.lt.s32.totalorder %v471, 16
    %vm474 = vcmp.lt.s32.totalorder %v472, 16
    %v475 = vsel %vm473, %v468, 0.0
    %v476 = vsel %vm474, %v469, 0.0
    %v477 = vsel %vm104, %v475, 0.0
    %v478 = vsel %vm104, %v476, 0.0
    %v479 = vadd.f32 %v477, %v478
    %v480 = vrot.slane %v479, 4
    %v481 = vadd.f32 %v479, %v480
    %v482 = vrot.slane %v481, 2
    %v483 = vadd.f32 %v481, %v482
    %v484 = vrot.slane %v483, 1
    %v485 = vadd.f32 %v483, %v484
    %v486 = vmul.f32 %v485, 0.0625
    %v487 = vsub.f32 %v468, %v486
    %v488 = vsub.f32 %v469, %v486
    %v489 = vmul.f32 %v487, %v487
    %v490 = vmul.f32 %v488, %v488
    %v491 = vsel %vm473, %v489, 0.0
    %v492 = vsel %vm474, %v490, 0.0
    %v493 = vsel %vm104, %v491, 0.0
    %v494 = vsel %vm104, %v492, 0.0
    %v495 = vadd.f32 %v493, %v494
    %v496 = vrot.slane %v495, 4
    %v497 = vadd.f32 %v495, %v496
    %v498 = vrot.slane %v497, 2
    %v499 = vadd.f32 %v497, %v498
    %v500 = vrot.slane %v499, 1
    %v501 = vadd.f32 %v499, %v500
    %v502 = vmul.f32 %v501, 0.0625
    %v503 = vadd.f32 %v502, 1e-05
    %v504 = vrsqrt.pop %v503
    %v505 = vmul.f32 %v504, %v503
    %v506 = vmul.f32 %v505, %v504
    %v507 = vmul.f32 0.5, %v506
    %v508 = vsub.f32 1.5, %v507
    %v509 = vmul.f32 %v504, %v508
    %vm510 = vweird.f32 %v503
    %vm511 = vweird.f32 %v504
    %vm512 = vmor %vm510, %vm511
    %v513 = vsel %vm512, %v504, %v509
    %v514 = vmul.f32 %v487, %v513
    %v515 = vmul.f32 %v488, %v513
    %v516 = vld [vmem:[%s9] sm:$0x1]
    %v518 = vperm.slane %v516, 0
    %v520 = vmul.f32 %v514, %v518
    %v521 = vmul.f32 %v515, %v518
    %v522 = vld [vmem:[%s10] sm:$0x1]
    %v524 = vperm.slane %v522, 0
    %v526 = vadd.f32 %v520, %v524
    %v527 = vadd.f32 %v521, %v524
    %528 = vst.msk [vmem:[%s11] sm:$0xff] %vm104, %v526
    %529 = vst.msk [vmem:[%s11 + $0x8] sm:$0xff] %vm104, %v527
  $region53: #{cgcnn_pred_forward.10} parent=0 // pred_fallthru
    _
  // Predicated region
  $region54: #{cgcnn_pred_forward.10} parent=0 // pred_check
    _
  $region55: #{cgcnn_pred_forward.10} parent=0 // pred_check_branch
    %531 = sbr.rel (0) target = $region57
  $region56: #{cgcnn_pred_forward.10} parent=0 // pred_region
    _
  $region57: #{cgcnn_pred_forward.10} parent=0 // pred_fallthru
    _
  // Predicated region
  $region58: #{cgcnn_pred_forward.10} parent=0 // pred_check
    _
  $region59: #{cgcnn_pred_forward.10} parent=0 // pred_check_branch
    %533 = sbr.rel (0) target = $region61
  $region60: #{cgcnn_pred_forward.10} parent=0 // pred_region
    _
  $region61: #{cgcnn_pred_forward.10} parent=0 // pred_fallthru
    _

// kernel: cgcnn_pred_forward.8
$region0: #{cgcnn_pred_forward.8}
  #allocation0 [shape = 'u32[]', space=smem, size = 0x4, offset = 0x4, fixed_abs, tag = 'smem constant byte address 0x4 - core index']
  #allocation1 [shape = 'u32[72,128]{1,0:T(1,128)}', space=vmem, size = 0x9000, scoped, tag = 'internal scratch']
  %s0 = inlined_call_operand.vmem [shape: bf16[32,64], index: 0, kind: input, shape index: {}]
  %s1 = inlined_call_operand.vmem [shape: bf16[32,64], index: 1, kind: input, shape index: {}]
  %s2 = inlined_call_operand.vmem [shape: bf16[32,64], index: 2, kind: input, shape index: {}]
  %s3 = inlined_call_operand.vmem [shape: bf16[64,128], index: 3, kind: input, shape index: {}]
  %s4 = inlined_call_operand.vmem [shape: bf16[64,128], index: 4, kind: input, shape index: {}]
  %s5 = inlined_call_operand.vmem [shape: bf16[64,128], index: 5, kind: input, shape index: {}]
  %s6 = inlined_call_operand.vmem [shape: f32[1,128], index: 6, kind: input, shape index: {}]
  %s7 = inlined_call_operand.vmem [shape: bf16[16,32], index: 7, kind: input, shape index: {}]
  %s8 = inlined_call_operand.vmem [shape: f32[16,64], index: 8, kind: input, shape index: {}]
  %s9 = inlined_call_operand.vmem [shape: f32[1,64], index: 9, kind: input, shape index: {}]
  %s10 = inlined_call_operand.vmem [shape: f32[1,64], index: 10, kind: input, shape index: {}]
  %s11 = inlined_call_operand.vmem [shape: f32[16,64], index: 11, kind: output, shape index: {}]
  %s12 = sld [smem:[#allocation0]]
  $region62: #{cgcnn_pred_forward.8} parent=0
    _
  %s14 = ssub.s32 1, %s12
  %s15 = scalar_select 0, %s14, %s12
  // Predicated region
  $region2: #{cgcnn_pred_forward.8} parent=0 // pred_check
    _
  $region3: #{cgcnn_pred_forward.8} parent=0 // pred_check_branch
    %17 = sbr.rel (0) target = $region5
  $region4: #{cgcnn_pred_forward.8} parent=0 // pred_region
    _
  $region5: #{cgcnn_pred_forward.8} parent=0 // pred_fallthru
    _
  // Predicated region
  $region6: #{cgcnn_pred_forward.8} parent=0 // pred_check
    _
  $region7: #{cgcnn_pred_forward.8} parent=0 // pred_check_branch
    %19 = sbr.rel (0) target = $region9
  $region8: #{cgcnn_pred_forward.8} parent=0 // pred_region
    _
  $region9: #{cgcnn_pred_forward.8} parent=0 // pred_fallthru
    _
  // Predicated region
  $region10: #{cgcnn_pred_forward.8} parent=0 // pred_check
    _
  $region11: #{cgcnn_pred_forward.8} parent=0 // pred_check_branch
    %21 = sbr.rel (0) target = $region13
  $region12: #{cgcnn_pred_forward.8} parent=0 // pred_region
    _
  $region13: #{cgcnn_pred_forward.8} parent=0 // pred_fallthru
    _
  // Predicated region
  $region14: #{cgcnn_pred_forward.8} parent=0 // pred_check
    _
  $region15: #{cgcnn_pred_forward.8} parent=0 // pred_check_branch
    %23 = sbr.rel (0) target = $region17
  $region16: #{cgcnn_pred_forward.8} parent=0 // pred_region
    _
  $region17: #{cgcnn_pred_forward.8} parent=0 // pred_fallthru
    _
  // Predicated region
  $region18: #{cgcnn_pred_forward.8} parent=0 // pred_check
    _
  $region19: #{cgcnn_pred_forward.8} parent=0 // pred_check_branch
    %25 = sbr.rel (0) target = $region21
  $region20: #{cgcnn_pred_forward.8} parent=0 // pred_region
    _
  $region21: #{cgcnn_pred_forward.8} parent=0 // pred_fallthru
    _
  // Predicated region
  $region22: #{cgcnn_pred_forward.8} parent=0 // pred_check
    _
  $region23: #{cgcnn_pred_forward.8} parent=0 // pred_check_branch
    %27 = sbr.rel (0) target = $region25
  $region24: #{cgcnn_pred_forward.8} parent=0 // pred_region
    _
  $region25: #{cgcnn_pred_forward.8} parent=0 // pred_fallthru
    _
  // Predicated region
  $region26: #{cgcnn_pred_forward.8} parent=0 // pred_check
    _
  $region27: #{cgcnn_pred_forward.8} parent=0 // pred_check_branch
    %29 = sbr.rel (0) target = $region29
  $region28: #{cgcnn_pred_forward.8} parent=0 // pred_region
    _
  $region29: #{cgcnn_pred_forward.8} parent=0 // pred_fallthru
    _
  // Predicated region
  $region30: #{cgcnn_pred_forward.8} parent=0 // pred_check
    _
  $region31: #{cgcnn_pred_forward.8} parent=0 // pred_check_branch
    %31 = sbr.rel (0) target = $region33
  $region32: #{cgcnn_pred_forward.8} parent=0 // pred_region
    _
  $region33: #{cgcnn_pred_forward.8} parent=0 // pred_fallthru
    _
  // Predicated region
  $region34: #{cgcnn_pred_forward.8} parent=0 // pred_check
    _
  $region35: #{cgcnn_pred_forward.8} parent=0 // pred_check_branch
    %33 = sbr.rel (0) target = $region37
  $region36: #{cgcnn_pred_forward.8} parent=0 // pred_region
    _
  $region37: #{cgcnn_pred_forward.8} parent=0 // pred_fallthru
    _
  // Predicated region
  $region38: #{cgcnn_pred_forward.8} parent=0 // pred_check
    _
  $region39: #{cgcnn_pred_forward.8} parent=0 // pred_check_branch
    %35 = sbr.rel (0) target = $region41
  $region40: #{cgcnn_pred_forward.8} parent=0 // pred_region
    _
  $region41: #{cgcnn_pred_forward.8} parent=0 // pred_fallthru
    _
  // Predicated region
  $region42: #{cgcnn_pred_forward.8} parent=0 // pred_check
    _
  $region43: #{cgcnn_pred_forward.8} parent=0 // pred_check_branch
    %37 = sbr.rel (0) target = $region45
  $region44: #{cgcnn_pred_forward.8} parent=0 // pred_region
    _
  $region45: #{cgcnn_pred_forward.8} parent=0 // pred_fallthru
    _
  %p39 = scmp.eq.s32.totalorder 0, 0
  // Predicated region
  $region46: #{cgcnn_pred_forward.8} parent=0 // pred_check
    %p40 = pneg %p39
  $region47: #{cgcnn_pred_forward.8} parent=0 // pred_check_branch
    %42 = sbr.rel (%p40) target = $region49
  $region48: #{cgcnn_pred_forward.8} parent=0 // pred_region
    %vm43 = vcmask 523264
    %44 = vst.msk [vmem:[%s11] sm:$0xff] %vm43, 0.0
    %45 = vst.msk [vmem:[%s11 + $0x8] sm:$0xff] %vm43, 0.0
  $region49: #{cgcnn_pred_forward.8} parent=0 // pred_fallthru
    _
  %v46 = vld [vmem:[%s0] sm:$0xf]
  %v47 = vld [vmem:[%s0 + $0x4] sm:$0xf]
  %v48 = vld [vmem:[%s0 + $0x8] sm:$0xf]
  %v49 = vld [vmem:[%s0 + $0xc] sm:$0xf]
  %v50 = vld [vmem:[%s3] sm:$0xf]
  %v51 = vld [vmem:[%s3 + $0x4] sm:$0xf]
  %v52 = vld [vmem:[%s3 + $0x8] sm:$0xf]
  %v53 = vld [vmem:[%s3 + $0xc] sm:$0xf]
  %v54 = vld [vmem:[%s3 + $0x10] sm:$0xf]
  %v55 = vld [vmem:[%s3 + $0x14] sm:$0xf]
  %v56 = vld [vmem:[%s3 + $0x18] sm:$0xf]
  %v57 = vld [vmem:[%s3 + $0x1c] sm:$0xf]
  %v58 = vld [vmem:[%s1] sm:$0xf]
  %v59 = vld [vmem:[%s1 + $0x4] sm:$0xf]
  %v60 = vld [vmem:[%s1 + $0x8] sm:$0xf]
  %v61 = vld [vmem:[%s1 + $0xc] sm:$0xf]
  %v62 = vld [vmem:[%s4] sm:$0xf]
  %v63 = vld [vmem:[%s4 + $0x4] sm:$0xf]
  %v64 = vld [vmem:[%s4 + $0x8] sm:$0xf]
  %v65 = vld [vmem:[%s4 + $0xc] sm:$0xf]
  %v66 = vld [vmem:[%s4 + $0x10] sm:$0xf]
  %v67 = vld [vmem:[%s4 + $0x14] sm:$0xf]
  %v68 = vld [vmem:[%s4 + $0x18] sm:$0xf]
  %v69 = vld [vmem:[%s4 + $0x1c] sm:$0xf]
  %v74 = vunpack.c.l.b16 %v58
  %v75 = vunpack.c.l.b16 %v59
  %v76 = vunpack.c.l.b16 %v60
  %v77 = vunpack.c.l.b16 %v61
  %v78 = vpack.c.b16 %v75, %v74
  %v79 = vpack.c.b16 %v77, %v76
  %v88 = vunpack.c.l.b16 %v62
  %v89 = vunpack.c.l.b16 %v63
  %v90 = vunpack.c.l.b16 %v64
  %v91 = vunpack.c.l.b16 %v65
  %v92 = vunpack.c.l.b16 %v66
  %v93 = vunpack.c.l.b16 %v67
  %v94 = vunpack.c.l.b16 %v68
  %v95 = vunpack.c.l.b16 %v69
  %v96 = vpack.c.b16 %v89, %v88
  %v97 = vpack.c.b16 %v91, %v90
  %v98 = vpack.c.b16 %v93, %v92
  %v99 = vpack.c.b16 %v95, %v94
  %vm104 = vcmask 523264
  %v106 = vsel %vm104, %v78, 0
  %v109 = vsel %vm104, %v79, 0
  %111 = vmatpush.bf16.msra.mxu0 0
  %112 = vmatpush.bf16.msra.mxu0 0
  %113 = vmatpush.bf16.msra.mxu0 0
  %114 = vmatpush.bf16.msra.mxu0 0
  %115 = vmatpush.bf16.msra.mxu0 %v99
  %116 = vmatpush.bf16.msra.mxu0 %v98
  %117 = vmatpush.bf16.msra.mxu0 %v97
  %118 = vmatpush.bf16.msra.mxu0 %v96
  %119 = vmatmul.bf16.gmra.mxu0 %v106
  %v120 = vpop.f32.mrf.mxu0
  %v121 = vadd.f32 0.0, %v120
  %v122 = vpop.f32.mrf.mxu0
  %v123 = vadd.f32 0.0, %v122
  %124 = vmatmul.bf16.gmra.mxu0 %v109
  %v125 = vpop.f32.mrf.mxu0
  %v126 = vadd.f32 0.0, %v125
  %v127 = vpop.f32.mrf.mxu0
  %v128 = vadd.f32 0.0, %v127
  %129 = vdwg.mxu0
  %v134 = vunpack.c.l.b16 %v46
  %v135 = vunpack.c.l.b16 %v47
  %v136 = vunpack.c.l.b16 %v48
  %v137 = vunpack.c.l.b16 %v49
  %v138 = vpack.c.b16 %v135, %v134
  %v139 = vpack.c.b16 %v137, %v136
  %v148 = vunpack.c.l.b16 %v50
  %v149 = vunpack.c.l.b16 %v51
  %v150 = vunpack.c.l.b16 %v52
  %v151 = vunpack.c.l.b16 %v53
  %v152 = vunpack.c.l.b16 %v54
  %v153 = vunpack.c.l.b16 %v55
  %v154 = vunpack.c.l.b16 %v56
  %v155 = vunpack.c.l.b16 %v57
  %v156 = vpack.c.b16 %v149, %v148
  %v157 = vpack.c.b16 %v151, %v150
  %v158 = vpack.c.b16 %v153, %v152
  %v159 = vpack.c.b16 %v155, %v154
  %v165 = vsel %vm104, %v138, 0
  %v168 = vsel %vm104, %v139, 0
  %170 = vmatpush.bf16.msra.mxu0 0
  %171 = vmatpush.bf16.msra.mxu0 0
  %172 = vmatpush.bf16.msra.mxu0 0
  %173 = vmatpush.bf16.msra.mxu0 0
  %174 = vmatpush.bf16.msra.mxu0 %v159
  %175 = vmatpush.bf16.msra.mxu0 %v158
  %176 = vmatpush.bf16.msra.mxu0 %v157
  %177 = vmatpush.bf16.msra.mxu0 %v156
  %178 = vmatmul.bf16.gmra.mxu0 %v165
  %v179 = vpop.f32.mrf.mxu0
  %v180 = vadd.f32 %v121, %v179
  %v181 = vpop.f32.mrf.mxu0
  %v182 = vadd.f32 %v123, %v181
  %183 = vmatmul.bf16.gmra.mxu0 %v168
  %v184 = vpop.f32.mrf.mxu0
  %v185 = vadd.f32 %v126, %v184
  %v186 = vpop.f32.mrf.mxu0
  %v187 = vadd.f32 %v128, %v186
  %188 = vdwg.mxu0
  %v189 = vld [vmem:[%s2] sm:$0xf]
  %v190 = vld [vmem:[%s2 + $0x4] sm:$0xf]
  %v191 = vld [vmem:[%s2 + $0x8] sm:$0xf]
  %v192 = vld [vmem:[%s2 + $0xc] sm:$0xf]
  %v193 = vld [vmem:[%s5] sm:$0xf]
  %v194 = vld [vmem:[%s5 + $0x4] sm:$0xf]
  %v195 = vld [vmem:[%s5 + $0x8] sm:$0xf]
  %v196 = vld [vmem:[%s5 + $0xc] sm:$0xf]
  %v197 = vld [vmem:[%s5 + $0x10] sm:$0xf]
  %v198 = vld [vmem:[%s5 + $0x14] sm:$0xf]
  %v199 = vld [vmem:[%s5 + $0x18] sm:$0xf]
  %v200 = vld [vmem:[%s5 + $0x1c] sm:$0xf]
  %v205 = vunpack.c.l.b16 %v189
  %v206 = vunpack.c.l.b16 %v190
  %v207 = vunpack.c.l.b16 %v191
  %v208 = vunpack.c.l.b16 %v192
  %v209 = vpack.c.b16 %v206, %v205
  %v210 = vpack.c.b16 %v208, %v207
  %v219 = vunpack.c.l.b16 %v193
  %v220 = vunpack.c.l.b16 %v194
  %v221 = vunpack.c.l.b16 %v195
  %v222 = vunpack.c.l.b16 %v196
  %v223 = vunpack.c.l.b16 %v197
  %v224 = vunpack.c.l.b16 %v198
  %v225 = vunpack.c.l.b16 %v199
  %v226 = vunpack.c.l.b16 %v200
  %v227 = vpack.c.b16 %v220, %v219
  %v228 = vpack.c.b16 %v222, %v221
  %v229 = vpack.c.b16 %v224, %v223
  %v230 = vpack.c.b16 %v226, %v225
  %v236 = vsel %vm104, %v209, 0
  %v239 = vsel %vm104, %v210, 0
  %241 = vmatpush.bf16.msra.mxu0 0
  %242 = vmatpush.bf16.msra.mxu0 0
  %243 = vmatpush.bf16.msra.mxu0 0
  %244 = vmatpush.bf16.msra.mxu0 0
  %245 = vmatpush.bf16.msra.mxu0 %v230
  %246 = vmatpush.bf16.msra.mxu0 %v229
  %247 = vmatpush.bf16.msra.mxu0 %v228
  %248 = vmatpush.bf16.msra.mxu0 %v227
  %249 = vmatmul.bf16.gmra.mxu0 %v236
  %v250 = vpop.f32.mrf.mxu0
  %v251 = vadd.f32 0.0, %v250
  %v252 = vpop.f32.mrf.mxu0
  %v253 = vadd.f32 0.0, %v252
  %254 = vmatmul.bf16.gmra.mxu0 %v239
  %v255 = vpop.f32.mrf.mxu0
  %v256 = vadd.f32 0.0, %v255
  %v257 = vpop.f32.mrf.mxu0
  %v258 = vadd.f32 0.0, %v257
  %259 = vdwg.mxu0
  %v260 = vadd.f32 %v180, %v251
  %v261 = vadd.f32 %v182, %v253
  %v262 = vadd.f32 %v185, %v256
  %v263 = vadd.f32 %v187, %v258
  %v264 = vld [vmem:[%s6] sm:$0x1]
  %v266 = vperm.slane %v264, 0
  %v268 = vadd.f32 %v260, %v266
  %v269 = vadd.f32 %v261, %v266
  %v270 = vadd.f32 %v262, %v266
  %v271 = vadd.f32 %v263, %v266
  %v272 = vxor.u32 %v268, 2147483648
  %v273 = vxor.u32 %v269, 2147483648
  %v274 = vxor.u32 %v270, 2147483648
  %v275 = vxor.u32 %v271, 2147483648
  %v276 = vmul.f32 %v272, 1.442695
  %v277 = vpow.pop %v276
  %v278 = vmul.f32 %v273, 1.442695
  %v279 = vpow.pop %v278
  %v280 = vmul.f32 %v274, 1.442695
  %v281 = vpow.pop %v280
  %v282 = vmul.f32 %v275, 1.442695
  %v283 = vpow.pop %v282
  %v284 = vadd.f32 %v277, 1.0
  %v285 = vadd.f32 %v279, 1.0
  %v286 = vadd.f32 %v281, 1.0
  %v287 = vadd.f32 %v283, 1.0
  %v288 = vrcp.pop %v284
  %v289 = vmul.f32 %v284, %v288
  %v290 = vsub.f32 1.0, %v289
  %v291 = vmul.f32 %v288, %v290
  %v292 = vadd.f32 %v288, %v291
  %vm293 = vweird.f32 %v284
  %vm294 = vweird.f32 %v288
  %vm295 = vmor %vm293, %vm294
  %v296 = vsel %vm295, %v288, %v292
  %v297 = vand.u32 2147483647, %v284
  %vm298 = vcmp.eq.f32.partialorder %v297, 8.507059e+37
  %v299 = vand.u32 %v284, 2147483648
  %v300 = vor.u32 1.1754944e-38, %v299
  %v301 = vsel %vm298, %v300, %v296
  %v302 = vmul.f32 1.0, %v301
  %v303 = vrcp.pop %v285
  %v304 = vmul.f32 %v285, %v303
  %v305 = vsub.f32 1.0, %v304
  %v306 = vmul.f32 %v303, %v305
  %v307 = vadd.f32 %v303, %v306
  %vm308 = vweird.f32 %v285
  %vm309 = vweird.f32 %v303
  %vm310 = vmor %vm308, %vm309
  %v311 = vsel %vm310, %v303, %v307
  %v312 = vand.u32 2147483647, %v285
  %vm313 = vcmp.eq.f32.partialorder %v312, 8.507059e+37
  %v314 = vand.u32 %v285, 2147483648
  %v315 = vor.u32 1.1754944e-38, %v314
  %v316 = vsel %vm313, %v315, %v311
  %v317 = vmul.f32 1.0, %v316
  %v318 = vrcp.pop %v286
  %v319 = vmul.f32 %v286, %v318
  %v320 = vsub.f32 1.0, %v319
  %v321 = vmul.f32 %v318, %v320
  %v322 = vadd.f32 %v318, %v321
  %vm323 = vweird.f32 %v286
  %vm324 = vweird.f32 %v318
  %vm325 = vmor %vm323, %vm324
  %v326 = vsel %vm325, %v318, %v322
  %v327 = vand.u32 2147483647, %v286
  %vm328 = vcmp.eq.f32.partialorder %v327, 8.507059e+37
  %v329 = vand.u32 %v286, 2147483648
  %v330 = vor.u32 1.1754944e-38, %v329
  %v331 = vsel %vm328, %v330, %v326
  %v332 = vmul.f32 1.0, %v331
  %v333 = vrcp.pop %v287
  %v334 = vmul.f32 %v287, %v333
  %v335 = vsub.f32 1.0, %v334
  %v336 = vmul.f32 %v333, %v335
  %v337 = vadd.f32 %v333, %v336
  %vm338 = vweird.f32 %v287
  %vm339 = vweird.f32 %v333
  %vm340 = vmor %vm338, %vm339
  %v341 = vsel %vm340, %v333, %v337
  %v342 = vand.u32 2147483647, %v287
  %vm343 = vcmp.eq.f32.partialorder %v342, 8.507059e+37
  %v344 = vand.u32 %v287, 2147483648
  %v345 = vor.u32 1.1754944e-38, %v344
  %v346 = vsel %vm343, %v345, %v341
  %v347 = vmul.f32 1.0, %v346
  %v348 = vmax.f32 %v268, 0.0
  %v349 = vmax.f32 %v269, 0.0
  %v350 = vmax.f32 %v270, 0.0
  %v351 = vmax.f32 %v271, 0.0
  %v352 = vand.u32 2147483647, %v268
  %v353 = vand.u32 2147483647, %v269
  %v354 = vand.u32 2147483647, %v270
  %v355 = vand.u32 2147483647, %v271
  %v356 = vsub.f32 0.0, %v352
  %v357 = vsub.f32 0.0, %v353
  %v358 = vsub.f32 0.0, %v354
  %v359 = vsub.f32 0.0, %v355
  %v360 = vmul.f32 %v356, 1.442695
  %v361 = vpow.pop %v360
  %v362 = vmul.f32 %v357, 1.442695
  %v363 = vpow.pop %v362
  %v364 = vmul.f32 %v358, 1.442695
  %v365 = vpow.pop %v364
  %v366 = vmul.f32 %v359, 1.442695
  %v367 = vpow.pop %v366
  %v368 = vadd.f32 %v361, 1.0
  %v369 = vlog2.pop %v368
  %v370 = vmul.f32 %v369, 0.6931472
  %v371 = vmul.f32 -0.5, %v361
  %v372 = vadd.f32 %v371, 1.0
  %v373 = vmul.f32 %v372, %v361
  %v374 = vand.u32 2147483647, %v361
  %vm375 = vcmp.lt.f32.partialorder %v374, 0.0004427343
  %v376 = vsel %vm375, %v373, %v370
  %v377 = vadd.f32 %v363, 1.0
  %v378 = vlog2.pop %v377
  %v379 = vmul.f32 %v378, 0.6931472
  %v380 = vmul.f32 -0.5, %v363
  %v381 = vadd.f32 %v380, 1.0
  %v382 = vmul.f32 %v381, %v363
  %v383 = vand.u32 2147483647, %v363
  %vm384 = vcmp.lt.f32.partialorder %v383, 0.0004427343
  %v385 = vsel %vm384, %v382, %v379
  %v386 = vadd.f32 %v365, 1.0
  %v387 = vlog2.pop %v386
  %v388 = vmul.f32 %v387, 0.6931472
  %v389 = vmul.f32 -0.5, %v365
  %v390 = vadd.f32 %v389, 1.0
  %v391 = vmul.f32 %v390, %v365
  %v392 = vand.u32 2147483647, %v365
  %vm393 = vcmp.lt.f32.partialorder %v392, 0.0004427343
  %v394 = vsel %vm393, %v391, %v388
  %v395 = vadd.f32 %v367, 1.0
  %v396 = vlog2.pop %v395
  %v397 = vmul.f32 %v396, 0.6931472
  %v398 = vmul.f32 -0.5, %v367
  %v399 = vadd.f32 %v398, 1.0
  %v400 = vmul.f32 %v399, %v367
  %v401 = vand.u32 2147483647, %v367
  %vm402 = vcmp.lt.f32.partialorder %v401, 0.0004427343
  %v403 = vsel %vm402, %v400, %v397
  %v404 = vadd.f32 %v348, %v376
  %v405 = vadd.f32 %v349, %v385
  %v406 = vadd.f32 %v350, %v394
  %v407 = vadd.f32 %v351, %v403
  %412 = vrot.lane.b32.xlu0 %v404, 64
  %v413 = vpop.permute.xlu0 %412
  %414 = vrot.lane.b32.xlu0 %v405, 64
  %v415 = vpop.permute.xlu0 %414
  %416 = vrot.lane.b32.xlu0 %v406, 64
  %v417 = vpop.permute.xlu0 %416
  %418 = vrot.lane.b32.xlu0 %v407, 64
  %v419 = vpop.permute.xlu0 %418
  %v424 = vmul.f32 %v302, %v413
  %v425 = vmul.f32 %v317, %v415
  %v426 = vmul.f32 %v332, %v417
  %v427 = vmul.f32 %v347, %v419
  %v428 = vld [vmem:[%s11] sm:$0xff]
  %v429 = vld [vmem:[%s11 + $0x8] sm:$0xff]
  %v430 = vld [vmem:[%s7] sm:$0xf]
  %v431 = vld [vmem:[%s7 + $0x4] sm:$0xf]
  %v432 = vpack.c.bf16 %v425, %v424
  %v433 = vpack.c.bf16 %v427, %v426
  %v436 = vunpack.c.l.b16 %v430
  %v437 = vunpack.c.l.b16 %v431
  %v438 = vpack.c.b16 %v437, %v436
  %vm439 = vcmask 261120
  %v441 = vsel %vm439, %v438, 0
  %443 = vmatpush.bf16.msra.mxu0 0
  %444 = vmatpush.bf16.msra.mxu0 0
  %445 = vmatpush.bf16.msra.mxu0 0
  %446 = vmatpush.bf16.msra.mxu0 0
  %447 = vmatpush.bf16.msra.mxu0 0
  %448 = vmatpush.bf16.msra.mxu0 0
  %449 = vmatpush.bf16.msra.mxu0 %v433
  %450 = vmatpush.bf16.msra.mxu0 %v432
  %451 = vmatmul.bf16.gmra.mxu0 %v441
  %v452 = vpop.f32.mrf.mxu0
  %v453 = vadd.f32 0.0, %v452
  %v454 = vpop.f32.mrf.mxu0
  %v455 = vadd.f32 0.0, %v454
  %456 = vdwg.mxu0
  %v457 = vadd.f32 %v428, %v453
  %v458 = vadd.f32 %v429, %v455
  %459 = vst.msk [vmem:[%s11] sm:$0xff] %vm104, %v457
  %460 = vst.msk [vmem:[%s11 + $0x8] sm:$0xff] %vm104, %v458
  // Predicated region
  $region50: #{cgcnn_pred_forward.8} parent=0 // pred_check
    %p461 = pneg %p39
  $region51: #{cgcnn_pred_forward.8} parent=0 // pred_check_branch
    %463 = sbr.rel (%p461) target = $region53
  $region52: #{cgcnn_pred_forward.8} parent=0 // pred_region
    %v464 = vld [vmem:[%s11] sm:$0xff]
    %v465 = vld [vmem:[%s11 + $0x8] sm:$0xff]
    %v466 = vld [vmem:[%s8] sm:$0xff]
    %v467 = vld [vmem:[%s8 + $0x8] sm:$0xff]
    %v468 = vadd.f32 %v464, %v466
    %v469 = vadd.f32 %v465, %v467
    %v470 = vlaneseq
    %v471 = vshrl.u32 %v470, 7
    %v472 = vadd.s32 %v471, 8
    %vm473 = vcmp.lt.s32.totalorder %v471, 16
    %vm474 = vcmp.lt.s32.totalorder %v472, 16
    %v475 = vsel %vm473, %v468, 0.0
    %v476 = vsel %vm474, %v469, 0.0
    %v477 = vsel %vm104, %v475, 0.0
    %v478 = vsel %vm104, %v476, 0.0
    %v479 = vadd.f32 %v477, %v478
    %v480 = vrot.slane %v479, 4
    %v481 = vadd.f32 %v479, %v480
    %v482 = vrot.slane %v481, 2
    %v483 = vadd.f32 %v481, %v482
    %v484 = vrot.slane %v483, 1
    %v485 = vadd.f32 %v483, %v484
    %v486 = vmul.f32 %v485, 0.0625
    %v487 = vsub.f32 %v468, %v486
    %v488 = vsub.f32 %v469, %v486
    %v489 = vmul.f32 %v487, %v487
    %v490 = vmul.f32 %v488, %v488
    %v491 = vsel %vm473, %v489, 0.0
    %v492 = vsel %vm474, %v490, 0.0
    %v493 = vsel %vm104, %v491, 0.0
    %v494 = vsel %vm104, %v492, 0.0
    %v495 = vadd.f32 %v493, %v494
    %v496 = vrot.slane %v495, 4
    %v497 = vadd.f32 %v495, %v496
    %v498 = vrot.slane %v497, 2
    %v499 = vadd.f32 %v497, %v498
    %v500 = vrot.slane %v499, 1
    %v501 = vadd.f32 %v499, %v500
    %v502 = vmul.f32 %v501, 0.0625
    %v503 = vadd.f32 %v502, 1e-05
    %v504 = vrsqrt.pop %v503
    %v505 = vmul.f32 %v504, %v503
    %v506 = vmul.f32 %v505, %v504
    %v507 = vmul.f32 0.5, %v506
    %v508 = vsub.f32 1.5, %v507
    %v509 = vmul.f32 %v504, %v508
    %vm510 = vweird.f32 %v503
    %vm511 = vweird.f32 %v504
    %vm512 = vmor %vm510, %vm511
    %v513 = vsel %vm512, %v504, %v509
    %v514 = vmul.f32 %v487, %v513
    %v515 = vmul.f32 %v488, %v513
    %v516 = vld [vmem:[%s9] sm:$0x1]
    %v518 = vperm.slane %v516, 0
    %v520 = vmul.f32 %v514, %v518
    %v521 = vmul.f32 %v515, %v518
    %v522 = vld [vmem:[%s10] sm:$0x1]
    %v524 = vperm.slane %v522, 0
    %v526 = vadd.f32 %v520, %v524
    %v527 = vadd.f32 %v521, %v524
    %v528 = vmax.f32 %v526, 0.0
    %v529 = vmax.f32 %v527, 0.0
    %530 = vst.msk [vmem:[%s11] sm:$0xff] %vm104, %v528
    %531 = vst.msk [vmem:[%s11 + $0x8] sm:$0xff] %vm104, %v529
  $region53: #{cgcnn_pred_forward.8} parent=0 // pred_fallthru
    _
  // Predicated region
  $region54: #{cgcnn_pred_forward.8} parent=0 // pred_check
    _
  $region55: #{cgcnn_pred_forward.8} parent=0 // pred_check_branch
    %533 = sbr.rel (0) target = $region57
  $region56: #{cgcnn_pred_forward.8} parent=0 // pred_region
    _
  $region57: #{cgcnn_pred_forward.8} parent=0 // pred_fallthru
    _
  // Predicated region
  $region58: #{cgcnn_pred_forward.8} parent=0 // pred_check
    _
  $region59: #{cgcnn_pred_forward.8} parent=0 // pred_check_branch
    %535 = sbr.rel (0) target = $region61
  $region60: #{cgcnn_pred_forward.8} parent=0 // pred_region
    _
  $region61: #{cgcnn_pred_forward.8} parent=0 // pred_fallthru
    _

// kernel: cgcnn_pred_forward.11
$region0: #{cgcnn_pred_forward.11}
  #allocation0 [shape = 'u32[]', space=smem, size = 0x4, offset = 0x4, fixed_abs, tag = 'smem constant byte address 0x4 - core index']
  #allocation1 [shape = 'u32[72,128]{1,0:T(1,128)}', space=vmem, size = 0x9000, scoped, tag = 'internal scratch']
  #allocation2 [shape = 'f32[2,64]{1,0:T(2,128)}', space=vmem, size = 0x400, scoped, tag = 'scratch operand']
  #allocation3 [shape = 'f32[1,1]{1,0:T(1,128)S(1)}', space=vmem, size = 0x200, scoped, tag = 'scoped memory for cgcnn_pred_forward.11']
  %s0 = inlined_call_operand.vmem [shape: bf16[2,16], index: 0, kind: input, shape index: {}]
  %s1 = inlined_call_operand.vmem [shape: f32[16,64], index: 1, kind: input, shape index: {}]
  %s2 = inlined_call_operand.vmem [shape: f32[2,1], index: 2, kind: input, shape index: {}]
  %s3 = inlined_call_operand.vmem [shape: f32[64,64], index: 3, kind: input, shape index: {}]
  %s4 = inlined_call_operand.vmem [shape: f32[1,64], index: 4, kind: input, shape index: {}]
  %s5 = inlined_call_operand.vmem [shape: f32[64,64], index: 5, kind: input, shape index: {}]
  %s6 = inlined_call_operand.vmem [shape: f32[1,64], index: 6, kind: input, shape index: {}]
  %s7 = inlined_call_operand.vmem [shape: f32[64,1], index: 7, kind: input, shape index: {}]
  %s8 = inlined_call_operand.<no memory space> [shape: f32[1,1], index: 8, kind: input, shape index: {}]
  %s9 = inlined_call_operand.vmem [shape: f32[2,1], index: 9, kind: output, shape index: {}]
  %s10 = sld [smem:[#allocation0]]
  $region54: #{cgcnn_pred_forward.11} parent=0
    _
  %s12 = ssub.s32 1, %s10
  %s13 = scalar_select 0, %s12, %s10
  %v14 = vstv %s8
  %15 = vst [vmem:[#allocation3] sm:$0x1] %v14
  // Predicated region
  $region2: #{cgcnn_pred_forward.11} parent=0 // pred_check
    _
  $region3: #{cgcnn_pred_forward.11} parent=0 // pred_check_branch
    %17 = sbr.rel (0) target = $region5
  $region4: #{cgcnn_pred_forward.11} parent=0 // pred_region
    _
  $region5: #{cgcnn_pred_forward.11} parent=0 // pred_fallthru
    _
  // Predicated region
  $region6: #{cgcnn_pred_forward.11} parent=0 // pred_check
    _
  $region7: #{cgcnn_pred_forward.11} parent=0 // pred_check_branch
    %19 = sbr.rel (0) target = $region9
  $region8: #{cgcnn_pred_forward.11} parent=0 // pred_region
    _
  $region9: #{cgcnn_pred_forward.11} parent=0 // pred_fallthru
    _
  // Predicated region
  $region10: #{cgcnn_pred_forward.11} parent=0 // pred_check
    _
  $region11: #{cgcnn_pred_forward.11} parent=0 // pred_check_branch
    %21 = sbr.rel (0) target = $region13
  $region12: #{cgcnn_pred_forward.11} parent=0 // pred_region
    _
  $region13: #{cgcnn_pred_forward.11} parent=0 // pred_fallthru
    _
  // Predicated region
  $region14: #{cgcnn_pred_forward.11} parent=0 // pred_check
    _
  $region15: #{cgcnn_pred_forward.11} parent=0 // pred_check_branch
    %23 = sbr.rel (0) target = $region17
  $region16: #{cgcnn_pred_forward.11} parent=0 // pred_region
    _
  $region17: #{cgcnn_pred_forward.11} parent=0 // pred_fallthru
    _
  // Predicated region
  $region18: #{cgcnn_pred_forward.11} parent=0 // pred_check
    _
  $region19: #{cgcnn_pred_forward.11} parent=0 // pred_check_branch
    %25 = sbr.rel (0) target = $region21
  $region20: #{cgcnn_pred_forward.11} parent=0 // pred_region
    _
  $region21: #{cgcnn_pred_forward.11} parent=0 // pred_fallthru
    _
  // Predicated region
  $region22: #{cgcnn_pred_forward.11} parent=0 // pred_check
    _
  $region23: #{cgcnn_pred_forward.11} parent=0 // pred_check_branch
    %27 = sbr.rel (0) target = $region25
  $region24: #{cgcnn_pred_forward.11} parent=0 // pred_region
    _
  $region25: #{cgcnn_pred_forward.11} parent=0 // pred_fallthru
    _
  // Predicated region
  $region26: #{cgcnn_pred_forward.11} parent=0 // pred_check
    _
  $region27: #{cgcnn_pred_forward.11} parent=0 // pred_check_branch
    %29 = sbr.rel (0) target = $region29
  $region28: #{cgcnn_pred_forward.11} parent=0 // pred_region
    _
  $region29: #{cgcnn_pred_forward.11} parent=0 // pred_fallthru
    _
  // Predicated region
  $region30: #{cgcnn_pred_forward.11} parent=0 // pred_check
    _
  $region31: #{cgcnn_pred_forward.11} parent=0 // pred_check_branch
    %31 = sbr.rel (0) target = $region33
  $region32: #{cgcnn_pred_forward.11} parent=0 // pred_region
    _
  $region33: #{cgcnn_pred_forward.11} parent=0 // pred_fallthru
    _
  // Predicated region
  $region34: #{cgcnn_pred_forward.11} parent=0 // pred_check
    _
  $region35: #{cgcnn_pred_forward.11} parent=0 // pred_check_branch
    %33 = sbr.rel (0) target = $region37
  $region36: #{cgcnn_pred_forward.11} parent=0 // pred_region
    _
  $region37: #{cgcnn_pred_forward.11} parent=0 // pred_fallthru
    _
  %p34 = scmp.eq.s32.totalorder 0, 0
  // Predicated region
  $region38: #{cgcnn_pred_forward.11} parent=0 // pred_check
    %p35 = pneg %p34
  $region39: #{cgcnn_pred_forward.11} parent=0 // pred_check_branch
    %37 = sbr.rel (%p35) target = $region41
  $region40: #{cgcnn_pred_forward.11} parent=0 // pred_region
    %vm38 = vcmask 517120
    %39 = vst.msk [vmem:[#allocation2] sm:$0x3] %vm38, 0.0
  $region41: #{cgcnn_pred_forward.11} parent=0 // pred_fallthru
    _
  %v40 = vld [vmem:[#allocation2] sm:$0x3]
  %v41 = vld [vmem:[%s0] sm:$0x1]
  %v42 = vunpack.c.l.bf16 %v41
  %v43 = vld [vmem:[%s1] sm:$0xff]
  %v44 = vld [vmem:[%s1 + $0x8] sm:$0xff]
  %vm45 = vcmask 130048
  %v47 = vsel %vm45, %v42, 0
  %49 = vmatpush.msra.mxu0 0.0
  %50 = vmatpush.msra.mxu0 0.0
  %51 = vmatpush.msra.mxu0 0.0
  %52 = vmatpush.msra.mxu0 0.0
  %53 = vmatpush.msra.mxu0 0.0
  %54 = vmatpush.msra.mxu0 0.0
  %55 = vmatpush.msra.mxu0 0.0
  %56 = vmatpush.msra.mxu0 0.0
  %57 = vmatpush.msra.mxu0 0.0
  %58 = vmatpush.msra.mxu0 0.0
  %59 = vmatpush.msra.mxu0 0.0
  %60 = vmatpush.msra.mxu0 0.0
  %61 = vmatpush.msra.mxu0 0.0
  %62 = vmatpush.msra.mxu0 0.0
  %63 = vmatpush.msra.mxu0 %v44
  %64 = vmatpush.msra.mxu0 %v43
  %65 = vmatmul.f32.gmra.mxu0 %v47
  %v66 = vpop.f32.mrf.mxu0
  %v67 = vadd.f32 0.0, %v66
  %68 = vdwg.mxu0
  %v69 = vadd.f32 %v40, %v67
  %vm70 = vcmask 517120
  %71 = vst.msk [vmem:[#allocation2] sm:$0x3] %vm70, %v69
  // Predicated region
  $region42: #{cgcnn_pred_forward.11} parent=0 // pred_check
    %p72 = pneg %p34
  $region43: #{cgcnn_pred_forward.11} parent=0 // pred_check_branch
    %74 = sbr.rel (%p72) target = $region45
  $region44: #{cgcnn_pred_forward.11} parent=0 // pred_region
    %v75 = vld [vmem:[#allocation2] sm:$0x3]
    %v76 = vld [vmem:[%s2] sm:$0x3]
    %78 = vset.pattern.permute.xlu0 0
    %79 = vperm.xlu0 %78, %v76
    %v80 = vpop.permute.xlu0 %79
    %v82 = vmul.f32 %v75, %v80
    %v83 = vld [vmem:[%s3] sm:$0xff]
    %v84 = vld [vmem:[%s3 + $0x8] sm:$0xff]
    %v85 = vld [vmem:[%s3 + $0x10] sm:$0xff]
    %v86 = vld [vmem:[%s3 + $0x18] sm:$0xff]
    %v87 = vld [vmem:[%s3 + $0x20] sm:$0xff]
    %v88 = vld [vmem:[%s3 + $0x28] sm:$0xff]
    %v89 = vld [vmem:[%s3 + $0x30] sm:$0xff]
    %v90 = vld [vmem:[%s3 + $0x38] sm:$0xff]
    %v91 = vld [vmem:[%s4] sm:$0x1]
    %v93 = vperm.slane %v91, 0
    %vm95 = vcmask 523264
    %v97 = vsel %vm95, %v82, 0
    %99 = vmatpush.msra.mxu0 0.0
    %100 = vmatpush.msra.mxu0 0.0
    %101 = vmatpush.msra.mxu0 0.0
    %102 = vmatpush.msra.mxu0 0.0
    %103 = vmatpush.msra.mxu0 0.0
    %104 = vmatpush.msra.mxu0 0.0
    %105 = vmatpush.msra.mxu0 0.0
    %106 = vmatpush.msra.mxu0 0.0
    %107 = vmatpush.msra.mxu0 %v90
    %108 = vmatpush.msra.mxu0 %v89
    %109 = vmatpush.msra.mxu0 %v88
    %110 = vmatpush.msra.mxu0 %v87
    %111 = vmatpush.msra.mxu0 %v86
    %112 = vmatpush.msra.mxu0 %v85
    %113 = vmatpush.msra.mxu0 %v84
    %114 = vmatpush.msra.mxu0 %v83
    %115 = vmatmul.f32.gmra.mxu0 %v97
    %v116 = vpop.f32.mrf.mxu0
    %v117 = vadd.f32 %v93, %v116
    %118 = vdwg.mxu0
    %v119 = vmax.f32 %v117, 0.0
    %v120 = vand.u32 2147483647, %v117
    %v121 = vsub.f32 0.0, %v120
    %v122 = vmul.f32 %v121, 1.442695
    %v123 = vpow.pop %v122
    %v124 = vadd.f32 %v123, 1.0
    %v125 = vlog2.pop %v124
    %v126 = vmul.f32 %v125, 0.6931472
    %v127 = vmul.f32 -0.5, %v123
    %v128 = vadd.f32 %v127, 1.0
    %v129 = vmul.f32 %v128, %v123
    %v130 = vand.u32 2147483647, %v123
    %vm131 = vcmp.lt.f32.partialorder %v130, 0.0004427343
    %v132 = vsel %vm131, %v129, %v126
    %v133 = vadd.f32 %v119, %v132
    %v134 = vld [vmem:[%s5] sm:$0xff]
    %v135 = vld [vmem:[%s5 + $0x8] sm:$0xff]
    %v136 = vld [vmem:[%s5 + $0x10] sm:$0xff]
    %v137 = vld [vmem:[%s5 + $0x18] sm:$0xff]
    %v138 = vld [vmem:[%s5 + $0x20] sm:$0xff]
    %v139 = vld [vmem:[%s5 + $0x28] sm:$0xff]
    %v140 = vld [vmem:[%s5 + $0x30] sm:$0xff]
    %v141 = vld [vmem:[%s5 + $0x38] sm:$0xff]
    %v142 = vld [vmem:[%s6] sm:$0x1]
    %v144 = vperm.slane %v142, 0
    %v147 = vsel %vm95, %v133, 0
    %149 = vmatpush.msra.mxu0 0.0
    %150 = vmatpush.msra.mxu0 0.0
    %151 = vmatpush.msra.mxu0 0.0
    %152 = vmatpush.msra.mxu0 0.0
    %153 = vmatpush.msra.mxu0 0.0
    %154 = vmatpush.msra.mxu0 0.0
    %155 = vmatpush.msra.mxu0 0.0
    %156 = vmatpush.msra.mxu0 0.0
    %157 = vmatpush.msra.mxu0 %v141
    %158 = vmatpush.msra.mxu0 %v140
    %159 = vmatpush.msra.mxu0 %v139
    %160 = vmatpush.msra.mxu0 %v138
    %161 = vmatpush.msra.mxu0 %v137
    %162 = vmatpush.msra.mxu0 %v136
    %163 = vmatpush.msra.mxu0 %v135
    %164 = vmatpush.msra.mxu0 %v134
    %165 = vmatmul.f32.gmra.mxu0 %v147
    %v166 = vpop.f32.mrf.mxu0
    %v167 = vadd.f32 %v144, %v166
    %168 = vdwg.mxu0
    %v169 = vmax.f32 %v167, 0.0
    %v170 = vand.u32 2147483647, %v167
    %v171 = vsub.f32 0.0, %v170
    %v172 = vmul.f32 %v171, 1.442695
    %v173 = vpow.pop %v172
    %v174 = vadd.f32 %v173, 1.0
    %v175 = vlog2.pop %v174
    %v176 = vmul.f32 %v175, 0.6931472
    %v177 = vmul.f32 -0.5, %v173
    %v178 = vadd.f32 %v177, 1.0
    %v179 = vmul.f32 %v178, %v173
    %v180 = vand.u32 2147483647, %v173
    %vm181 = vcmp.lt.f32.partialorder %v180, 0.0004427343
    %v182 = vsel %vm181, %v179, %v176
    %v183 = vadd.f32 %v169, %v182
    %v184 = vld [vmem:[%s7] sm:$0xff]
    %v185 = vld [vmem:[%s7 + $0x8] sm:$0xff]
    %v186 = vld [vmem:[%s7 + $0x10] sm:$0xff]
    %v187 = vld [vmem:[%s7 + $0x18] sm:$0xff]
    %v188 = vld [vmem:[%s7 + $0x20] sm:$0xff]
    %v189 = vld [vmem:[%s7 + $0x28] sm:$0xff]
    %v190 = vld [vmem:[%s7 + $0x30] sm:$0xff]
    %v191 = vld [vmem:[%s7 + $0x38] sm:$0xff]
    %v192 = vld [vmem:[#allocation3] sm:$0x1]
    %v194 = vperm.slane %v192, 0
    %v197 = vsel %vm95, %v183, 0
    %199 = vmatpush.msra.mxu0 0.0
    %200 = vmatpush.msra.mxu0 0.0
    %201 = vmatpush.msra.mxu0 0.0
    %202 = vmatpush.msra.mxu0 0.0
    %203 = vmatpush.msra.mxu0 0.0
    %204 = vmatpush.msra.mxu0 0.0
    %205 = vmatpush.msra.mxu0 0.0
    %206 = vmatpush.msra.mxu0 0.0
    %207 = vmatpush.msra.mxu0 %v191
    %208 = vmatpush.msra.mxu0 %v190
    %209 = vmatpush.msra.mxu0 %v189
    %210 = vmatpush.msra.mxu0 %v188
    %211 = vmatpush.msra.mxu0 %v187
    %212 = vmatpush.msra.mxu0 %v186
    %213 = vmatpush.msra.mxu0 %v185
    %214 = vmatpush.msra.mxu0 %v184
    %215 = vmatmul.f32.gmra.mxu0 %v197
    %v216 = vpop.f32.mrf.mxu0
    %v217 = vadd.f32 %v194, %v216
    %218 = vdwg.mxu0
    %vm219 = vcmask 1024
    %220 = vst.msk [vmem:[%s9] sm:$0x3] %vm219, %v217
  $region45: #{cgcnn_pred_forward.11} parent=0 // pred_fallthru
    _
  // Predicated region
  $region46: #{cgcnn_pred_forward.11} parent=0 // pred_check
    _
  $region47: #{cgcnn_pred_forward.11} parent=0 // pred_check_branch
    %222 = sbr.rel (0) target = $region49
  $region48: #{cgcnn_pred_forward.11} parent=0 // pred_region
    _
  $region49: #{cgcnn_pred_forward.11} parent=0 // pred_fallthru
    _
  // Predicated region
  $region50: #{cgcnn_pred_forward.11} parent=0 // pred_check
    _
  $region51: #{cgcnn_pred_forward.11} parent=0 // pred_check_branch
    %224 = sbr.rel (0) target = $region53
  $region52: #{cgcnn_pred_forward.11} parent=0 // pred_region
    _
  $region53: #{cgcnn_pred_forward.11} parent=0 // pred_fallthru
    _

</llo_original>
